<compile_context>
chip_gen: v7x
topology: tpu7x:2x2x1
jax: 0.10.0
libtpu: 0.0.40
codegen_flags: <defaults>
</compile_context>

<pallas_src>
import jax
import jax.numpy as jnp
from jax.experimental import pallas as pl
from jax.experimental.pallas import tpu as pltpu

# ---------------- synthetic small CLIPVisionConfig ----------------
IMG_SIZE = 16
PATCH = 8
CHANNELS = 3
HIDDEN = 32
HEADS = 4
HEAD_DIM = HIDDEN // HEADS
FFN = 64
NUM_LAYERS = 3            # hidden_states has NUM_LAYERS + 1 entries
SELECT_LAYER = -2         # -> run NUM_LAYERS - 1 encoder layers
N_RUN = NUM_LAYERS + SELECT_LAYER + 1
GRID_HW = IMG_SIZE // PATCH
NUM_PATCHES = GRID_HW * GRID_HW
SEQ = NUM_PATCHES + 1     # +1 CLS token
SEQ_PAD = ((SEQ + 7) // 8) * 8   # pad sequence rows to a full sublane group
PATCH_DIM = CHANNELS * PATCH * PATCH
EPS = 1e-5
ATTN_SCALE = HEAD_DIM ** -0.5
VEC_LANES = 128           # lane-dense packing width for the per-layer vectors


# ---------------- in-kernel helpers ----------------
def _layernorm(x, g, b):
    mu = jnp.mean(x, axis=-1, keepdims=True)
    xc = x - mu
    var = jnp.mean(xc * xc, axis=-1, keepdims=True)
    return xc * jax.lax.rsqrt(var + EPS) * g + b


# ---------------- fused tower kernel ----------------
def _tower_kernel(xp_ref, patch_w_ref, cls_ref, pos_ref, pre_g_ref, pre_b_ref,
                  vec_ref, wqkv_ref, wo_ref, w1_ref, w2_ref,
                  out_ref, x_sc):
    layer = pl.program_id(1)
    bb = x_sc.shape[0]                                   # images per grid step

    # ----- layer 0: patch embed + CLS/pos + pre-LayerNorm into resident VMEM -----
    @pl.when(layer == 0)
    def _():
        x_sc[...] = jnp.zeros_like(x_sc)                 # zero the padded rows
        cls_row = cls_ref[...] + pos_ref[0:1, :]         # [1, D]
        for b in range(bb):                              # tiny static unroll
            pe = jnp.dot(xp_ref[b], patch_w_ref[...],
                         preferred_element_type=jnp.float32)        # [N, D]
            x_sc[b, 0:1, :] = cls_row
            x_sc[b, 1:SEQ, :] = pe + pos_ref[1:SEQ, :]
        x_sc[...] = _layernorm(x_sc[...], pre_g_ref[...], pre_b_ref[...])

    x = x_sc[...]                                        # [BB, S_PAD, D] f32

    # packed per-layer vectors: one [8, 128] lane-dense tile per layer
    ln1_g = vec_ref[0, 0:1, :HIDDEN]
    ln1_b = vec_ref[0, 1:2, :HIDDEN]
    ln2_g = vec_ref[0, 2:3, :HIDDEN]
    ln2_b = vec_ref[0, 3:4, :HIDDEN]
    bo = vec_ref[0, 4:5, :HIDDEN]
    b2 = vec_ref[0, 5:6, :HIDDEN]
    bqkv = vec_ref[0, 6:7, :3 * HIDDEN]
    b1 = vec_ref[0, 7:8, :FFN]

    # ----- self-attention -----
    h = _layernorm(x, ln1_g, ln1_b).astype(jnp.bfloat16)             # [BB,S,D]
    qkv = jnp.dot(h.reshape(bb * SEQ_PAD, HIDDEN), wqkv_ref[0],
                  preferred_element_type=jnp.float32) + bqkv         # [BB*S,3D]
    qkv = qkv.reshape(bb, SEQ_PAD, 3 * HIDDEN)

    def head_slices(base):
        return [qkv[:, :, base + h0 * HEAD_DIM: base + (h0 + 1) * HEAD_DIM]
                for h0 in range(HEADS)]

    q = jnp.concatenate(head_slices(0), axis=0)                      # [H*BB,S,Dh]
    k = jnp.concatenate(head_slices(HIDDEN), axis=0)
    v = jnp.concatenate(head_slices(2 * HIDDEN), axis=0)
    q = (q * ATTN_SCALE).astype(jnp.bfloat16)
    k = k.astype(jnp.bfloat16)
    v = v.astype(jnp.bfloat16)

    logits = jax.lax.dot_general(q, k, (((2,), (2,)), ((0,), (0,))),
                                 preferred_element_type=jnp.float32)  # [H*BB,S,S]
    key_ok = jax.lax.broadcasted_iota(jnp.int32, (SEQ_PAD, SEQ_PAD), 1) < SEQ
    logits = jnp.where(key_ok[None], logits, -1e30)       # mask padded key rows
    e = jnp.exp(logits - jnp.max(logits, axis=-1, keepdims=True))
    p = e * pl.reciprocal(jnp.sum(e, axis=-1, keepdims=True), approx=True)
    ctx = jax.lax.dot_general(p.astype(jnp.bfloat16), v,
                              (((2,), (1,)), ((0,), (0,))),
                              preferred_element_type=jnp.float32)     # [H*BB,S,Dh]
    # re-assemble heads along lanes -> [BB, S, H*Dh]; head sum folds into wo matmul
    ctx = jnp.concatenate([ctx[h0 * bb:(h0 + 1) * bb] for h0 in range(HEADS)],
                          axis=-1)
    attn = jnp.dot(ctx.reshape(bb * SEQ_PAD, HIDDEN).astype(jnp.bfloat16),
                   wo_ref[0], preferred_element_type=jnp.float32) + bo
    x1 = x + attn.reshape(bb, SEQ_PAD, HIDDEN)                        # residual 1

    # ----- MLP (quick_gelu) -----
    h2 = _layernorm(x1, ln2_g, ln2_b).astype(jnp.bfloat16)
    m = jnp.dot(h2.reshape(bb * SEQ_PAD, HIDDEN), w1_ref[0],
                preferred_element_type=jnp.float32) + b1
    m = m * jax.nn.sigmoid(1.702 * m)                                 # f32 VPU/EUP
    m = jnp.dot(m.astype(jnp.bfloat16), w2_ref[0],
                preferred_element_type=jnp.float32) + b2
    x2 = x1 + m.reshape(bb, SEQ_PAD, HIDDEN)                          # residual 2

    x_sc[...] = x2

    # store only once (last run layer), only the patch rows (CLS dropped here)
    @pl.when(layer == pl.num_programs(1) - 1)
    def _():
        out_ref[...] = x2[:, 1:SEQ, :]


# ---------------- BlockSpec helpers ----------------
def _full_spec(shape):
    zeros = (0,) * len(shape)
    return pl.BlockSpec(tuple(shape), lambda b, l, zeros=zeros: zeros)


def _layer_spec(full_shape):
    block = (1,) + tuple(full_shape[1:])
    rest = (0,) * (len(full_shape) - 1)
    return pl.BlockSpec(block, lambda b, l, rest=rest: (l,) + rest)


# ---------------- weight packing (pure JAX, outside the kernel) ----------------
def _pack_layers(params):
    ls = params["layers"][:N_RUN]
    assert 3 * HIDDEN <= VEC_LANES and FFN <= VEC_LANES

    def pad_row(v):
        v = v.reshape(1, -1)
        return jnp.pad(v, ((0, 0), (0, VEC_LANES - v.shape[1])))

    def stack(fn):
        return jnp.stack([fn(p) for p in ls], axis=0)

    return {
        # merged projection weights, one layer streamed per grid step (bf16 MXU)
        "wqkv": stack(lambda p: jnp.concatenate(
            [p["wq"], p["wk"], p["wv"]], axis=1)).astype(jnp.bfloat16),  # [L,D,3D]
        "wo": stack(lambda p: p["wo"]).astype(jnp.bfloat16),             # [L,D,D]
        "w1": stack(lambda p: p["w1"]).astype(jnp.bfloat16),             # [L,D,F]
        "w2": stack(lambda p: p["w2"]).astype(jnp.bfloat16),             # [L,F,D]
        # all 8 small per-layer vectors in ONE lane-dense [L, 8, 128] tile (1 DMA)
        "vec": stack(lambda p: jnp.concatenate([
            pad_row(p["ln1_g"]), pad_row(p["ln1_b"]),
            pad_row(p["ln2_g"]), pad_row(p["ln2_b"]),
            pad_row(p["bo"]), pad_row(p["b2"]),
            pad_row(jnp.concatenate([p["bq"], p["bk"], p["bv"]], axis=1)),
            pad_row(p["b1"])], axis=0)),                                 # [L,8,128]
    }


# ---------------- glue: patch extraction (im2col), params, forward ----------------
def extract_patches(images):
    # images: [B, C, H, W] -> [B, num_patches, C*P*P] (row-major patches,
    # matching Conv2d(stride=patch) followed by flatten(2).transpose(1, 2)).
    B = images.shape[0]
    x = images.reshape(B, CHANNELS, GRID_HW, PATCH, GRID_HW, PATCH)
    x = x.transpose(0, 2, 4, 1, 3, 5)
    return x.reshape(B, NUM_PATCHES, PATCH_DIM)


def init_params(key):
    scale = 0.02
    ks = jax.random.split(key, 5 + NUM_LAYERS)
    params = {
        "patch_w": scale * jax.random.normal(ks[0], (PATCH_DIM, HIDDEN), jnp.float32),
        "cls": scale * jax.random.normal(ks[1], (1, 1, HIDDEN), jnp.float32),
        "pos": scale * jax.random.normal(ks[2], (SEQ, HIDDEN), jnp.float32),
        "pre_ln_g": 1.0 + scale * jax.random.normal(ks[3], (1, HIDDEN), jnp.float32),
        "pre_ln_b": scale * jax.random.normal(ks[4], (1, HIDDEN), jnp.float32),
        "layers": [],
    }
    for i in range(NUM_LAYERS):
        kk = jax.random.split(ks[5 + i], 16)
        lp = {
            "ln1_g": 1.0 + scale * jax.random.normal(kk[0], (1, HIDDEN), jnp.float32),
            "ln1_b": scale * jax.random.normal(kk[1], (1, HIDDEN), jnp.float32),
            "wq": scale * jax.random.normal(kk[2], (HIDDEN, HIDDEN), jnp.float32),
            "bq": scale * jax.random.normal(kk[3], (1, HIDDEN), jnp.float32),
            "wk": scale * jax.random.normal(kk[4], (HIDDEN, HIDDEN), jnp.float32),
            "bk": scale * jax.random.normal(kk[5], (1, HIDDEN), jnp.float32),
            "wv": scale * jax.random.normal(kk[6], (HIDDEN, HIDDEN), jnp.float32),
            "bv": scale * jax.random.normal(kk[7], (1, HIDDEN), jnp.float32),
            "wo": scale * jax.random.normal(kk[8], (HIDDEN, HIDDEN), jnp.float32),
            "bo": scale * jax.random.normal(kk[9], (1, HIDDEN), jnp.float32),
            "ln2_g": 1.0 + scale * jax.random.normal(kk[10], (1, HIDDEN), jnp.float32),
            "ln2_b": scale * jax.random.normal(kk[11], (1, HIDDEN), jnp.float32),
            "w1": scale * jax.random.normal(kk[12], (HIDDEN, FFN), jnp.float32),
            "b1": scale * jax.random.normal(kk[13], (1, FFN), jnp.float32),
            "w2": scale * jax.random.normal(kk[14], (FFN, HIDDEN), jnp.float32),
            "b2": scale * jax.random.normal(kk[15], (1, HIDDEN), jnp.float32),
        }
        params["layers"].append(lp)
    return params


def clip_vision_tower_forward(images, params):
    """images: [B, 3, H, W] (NCHW). Returns patch features [B, num_patches, D]."""
    B = images.shape[0]
    # fold the (small) batch into the block so each grid step does dense work
    BB = B if B <= 8 else 8
    while B % BB:
        BB -= 1

    xp = extract_patches(images.astype(jnp.float32))
    packed = _pack_layers(params)
    cls2d = params["cls"].reshape(1, HIDDEN)

    in_arrays = [
        xp, params["patch_w"], cls2d, params["pos"],
        params["pre_ln_g"], params["pre_ln_b"],
        packed["vec"], packed["wqkv"], packed["wo"], packed["w1"], packed["w2"],
    ]
    in_specs = [
        pl.BlockSpec((BB, NUM_PATCHES, PATCH_DIM), lambda b, l: (b, 0, 0)),  # xp
        _full_spec(params["patch_w"].shape),
        _full_spec(cls2d.shape),
        _full_spec(params["pos"].shape),
        _full_spec(params["pre_ln_g"].shape),
        _full_spec(params["pre_ln_b"].shape),
        _layer_spec(packed["vec"].shape),
        _layer_spec(packed["wqkv"].shape),
        _layer_spec(packed["wo"].shape),
        _layer_spec(packed["w1"].shape),
        _layer_spec(packed["w2"].shape),
    ]

    feats = pl.pallas_call(
        _tower_kernel,
        out_shape=jax.ShapeDtypeStruct((B, NUM_PATCHES, HIDDEN), jnp.float32),
        grid_spec=pltpu.PrefetchScalarGridSpec(
            num_scalar_prefetch=0,
            grid=(B // BB, N_RUN),
            in_specs=in_specs,
            out_specs=pl.BlockSpec((BB, NUM_PATCHES, HIDDEN),
                                   lambda b, l: (b, 0, 0)),
            scratch_shapes=[pltpu.VMEM((BB, SEQ_PAD, HIDDEN), jnp.float32)],
        ),
        compiler_params=pltpu.CompilerParams(
            dimension_semantics=("parallel", "arbitrary"),
            # toy config needs <1 MiB; at real CLIP-L sizes re-tile the FFN
            # weights (or Buffered(1)) so double-buffered streaming fits v7x.
            vmem_limit_bytes=32 * 1024 * 1024),
    )(*in_arrays)

    # select_feature == 'patch': CLS token already dropped inside the kernel.
    return feats.astype(images.dtype)


# ---------------- pure-JAX f32 reference (for verification) ----------------
def _ln_ref(x, g, b):
    mu = jnp.mean(x, axis=-1, keepdims=True)
    var = jnp.mean((x - mu) ** 2, axis=-1, keepdims=True)
    return (x - mu) * jax.lax.rsqrt(var + EPS) * g + b


def reference_forward(images, params):
    B = images.shape[0]
    xp = extract_patches(images)
    emb = jnp.einsum("bnk,kd->bnd", xp, params["patch_w"], precision="highest")
    cls = jnp.broadcast_to(params["cls"], (B, 1, HIDDEN))
    x = jnp.concatenate([cls, emb], axis=1) + params["pos"]
    x = _ln_ref(x, params["pre_ln_g"], params["pre_ln_b"])
    for i in range(N_RUN):
        p = params["layers"][i]
        h = _ln_ref(x, p["ln1_g"], p["ln1_b"])
        q = jnp.einsum("bsd,de->bse", h, p["wq"], precision="highest") + p["bq"]
        k = jnp.einsum("bsd,de->bse", h, p["wk"], precision="highest") + p["bk"]
        v = jnp.einsum("bsd,de->bse", h, p["wv"], precision="highest") + p["bv"]
        q = q.reshape(B, SEQ, HEADS, HEAD_DIM) * ATTN_SCALE
        k = k.reshape(B, SEQ, HEADS, HEAD_DIM)
        v = v.reshape(B, SEQ, HEADS, HEAD_DIM)
        logits = jnp.einsum("bqhd,bkhd->bhqk", q, k, precision="highest")
        pa = jax.nn.softmax(logits, axis=-1)
        ctx = jnp.einsum("bhqk,bkhd->bqhd", pa, v, precision="highest")
        ctx = ctx.reshape(B, SEQ, HIDDEN)
        attn_out = jnp.einsum("bsd,de->bse", ctx, p["wo"], precision="highest") + p["bo"]
        x = x + attn_out
        h2 = _ln_ref(x, p["ln2_g"], p["ln2_b"])
        m = jnp.einsum("bsd,df->bsf", h2, p["w1"], precision="highest") + p["b1"]
        m = m * jax.nn.sigmoid(1.702 * m)
        m = jnp.einsum("bsf,fd->bsd", m, p["w2"], precision="highest") + p["b2"]
        x = x + m
    return x[:, 1:]


if __name__ == "__main__":
    key = jax.random.PRNGKey(0)
    kp, kx = jax.random.split(key)
    params = init_params(kp)
    images = jax.random.normal(kx, (2, CHANNELS, IMG_SIZE, IMG_SIZE), jnp.float32)

    out = clip_vision_tower_forward(images, params)
    out = jax.block_until_ready(out)

    assert out.shape == (2, NUM_PATCHES, HIDDEN), out.shape
    ref = reference_forward(images, params)
    err = float(jnp.max(jnp.abs(out - ref)))
    # bf16 MXU inputs (f32 accumulation / f32 residual stream) vs f32 reference.
    if err > 1e-2:
        raise AssertionError(f"mismatch vs reference: max abs err {err}")
    print("KERNEL_OK")
</pallas_src>

<mosaic_0001>
module attributes {stable_mosaic.version = 11 : i64} {
  func.func @_tower_kernel(%arg0: i32, %arg1: i32, %arg2: memref<2x4x192xf32, #tpu.memory_space<vmem>>, %arg3: memref<192x32xf32, #tpu.memory_space<vmem>>, %arg4: memref<1x32xf32, #tpu.memory_space<vmem>>, %arg5: memref<5x32xf32, #tpu.memory_space<vmem>>, %arg6: memref<1x32xf32, #tpu.memory_space<vmem>>, %arg7: memref<1x32xf32, #tpu.memory_space<vmem>>, %arg8: memref<1x8x128xf32, #tpu.memory_space<vmem>>, %arg9: memref<1x32x96xbf16, #tpu.memory_space<vmem>>, %arg10: memref<1x32x32xbf16, #tpu.memory_space<vmem>>, %arg11: memref<1x32x64xbf16, #tpu.memory_space<vmem>>, %arg12: memref<1x64x32xbf16, #tpu.memory_space<vmem>>, %arg13: memref<2x4x32xf32, #tpu.memory_space<vmem>>, %arg14: memref<2x8x32xf32, #tpu.memory_space<vmem>>) attributes {dimension_semantics = [#tpu.dimension_semantics<parallel>, #tpu.dimension_semantics<arbitrary>], iteration_bounds = array<i64: 1, 2>, scalar_prefetch = 0 : i64, scratch_operands = 1 : i64, tpu.core_type = #tpu.core_type<tc>, window_params = [{transform_indices = @transform_0, window_bounds = array<i64: 2, 4, 192>}, {pipeline_mode = #tpu.pipeline_mode<synchronous>, transform_indices = @transform_1, window_bounds = array<i64: 192, 32>}, {pipeline_mode = #tpu.pipeline_mode<synchronous>, transform_indices = @transform_2, window_bounds = array<i64: 1, 32>}, {pipeline_mode = #tpu.pipeline_mode<synchronous>, transform_indices = @transform_3, window_bounds = array<i64: 5, 32>}, {pipeline_mode = #tpu.pipeline_mode<synchronous>, transform_indices = @transform_4, window_bounds = array<i64: 1, 32>}, {pipeline_mode = #tpu.pipeline_mode<synchronous>, transform_indices = @transform_5, window_bounds = array<i64: 1, 32>}, {transform_indices = @transform_6, window_bounds = array<i64: 1, 8, 128>}, {transform_indices = @transform_7, window_bounds = array<i64: 1, 32, 96>}, {transform_indices = @transform_8, window_bounds = array<i64: 1, 32, 32>}, {transform_indices = @transform_9, window_bounds = array<i64: 1, 32, 64>}, {transform_indices = @transform_10, window_bounds = array<i64: 1, 64, 32>}, {transform_indices = @transform_11, window_bounds = array<i64: 2, 4, 32>}]} {
    %c0_i32 = arith.constant 0 : i32
    %0 = arith.cmpi eq, %arg1, %c0_i32 : i32
    %1 = arith.extui %0 : i1 to i32
    %c0_i32_0 = arith.constant 0 : i32
    %2 = arith.cmpi ne, %1, %c0_i32_0 : i32
    scf.if %2 {
      %cst_57 = arith.constant 0.000000e+00 : f32
      %154 = vector.broadcast %cst_57 : f32 to vector<2x8x32xf32>
      %c0_58 = arith.constant 0 : index
      %c0_59 = arith.constant 0 : index
      %c0_60 = arith.constant 0 : index
      %155 = vector.load %arg14[%c0_58, %c0_59, %c0_60] : memref<2x8x32xf32, #tpu.memory_space<vmem>>, vector<2x8x32xf32>
      tpu.vector_store %arg14[%c0_58, %c0_59, %c0_60], %154 {strides = array<i32>} : memref<2x8x32xf32, #tpu.memory_space<vmem>>, vector<2x8x32xf32>,
      %c0_61 = arith.constant 0 : index
      %c0_62 = arith.constant 0 : index
      %156 = vector.load %arg4[%c0_61, %c0_62] : memref<1x32xf32, #tpu.memory_space<vmem>>, vector<1x32xf32>
      %c0_63 = arith.constant 0 : index
      %c0_64 = arith.constant 0 : index
      %157 = vector.load %arg5[%c0_63, %c0_64] : memref<5x32xf32, #tpu.memory_space<vmem>>, vector<1x32xf32>
      %158 = arith.addf %156, %157 : vector<1x32xf32>
      %c0_65 = arith.constant 0 : index
      %c0_66 = arith.constant 0 : index
      %c0_67 = arith.constant 0 : index
      %159 = vector.load %arg2[%c0_65, %c0_66, %c0_67] : memref<2x4x192xf32, #tpu.memory_space<vmem>>, vector<1x4x192xf32>
      %160 = vector.shape_cast %159 : vector<1x4x192xf32> to vector<4x192xf32>
      %c0_68 = arith.constant 0 : index
      %c0_69 = arith.constant 0 : index
      %161 = vector.load %arg3[%c0_68, %c0_69] : memref<192x32xf32, #tpu.memory_space<vmem>>, vector<192x32xf32>
      %cst_70 = arith.constant dense<0.000000e+00> : vector<4x32xf32>
      %162 = tpu.matmul %160, %161, %cst_70 {dimension_numbers = #tpu.dot_dimension_numbers<[1], [0], [0], [1], [0, 0, 1, 1], [], []>} : vector<4x192xf32>, vector<192x32xf32>, vector<4x32xf32> -> vector<4x32xf32>
      %c0_71 = arith.constant 0 : index
      %c0_72 = arith.constant 0 : index
      %c0_73 = arith.constant 0 : index
      %163 = vector.load %arg14[%c0_71, %c0_72, %c0_73] : memref<2x8x32xf32, #tpu.memory_space<vmem>>, vector<1x1x32xf32>
      %164 = vector.shape_cast %163 : vector<1x1x32xf32> to vector<1x32xf32>
      %165 = vector.shape_cast %158 : vector<1x32xf32> to vector<1x1x32xf32>
      tpu.vector_store %arg14[%c0_71, %c0_72, %c0_73], %165 {strides = array<i32>} : memref<2x8x32xf32, #tpu.memory_space<vmem>>, vector<1x1x32xf32>,
      %c1_74 = arith.constant 1 : index
      %c0_75 = arith.constant 0 : index
      %166 = vector.load %arg5[%c1_74, %c0_75] : memref<5x32xf32, #tpu.memory_space<vmem>>, vector<4x32xf32>
      %167 = arith.addf %162, %166 : vector<4x32xf32>
      %c0_76 = arith.constant 0 : index
      %c1_77 = arith.constant 1 : index
      %c0_78 = arith.constant 0 : index
      %168 = vector.load %arg14[%c0_76, %c1_77, %c0_78] : memref<2x8x32xf32, #tpu.memory_space<vmem>>, vector<1x4x32xf32>
      %169 = vector.shape_cast %168 : vector<1x4x32xf32> to vector<4x32xf32>
      %170 = vector.shape_cast %167 : vector<4x32xf32> to vector<1x4x32xf32>
      tpu.vector_store %arg14[%c0_76, %c1_77, %c0_78], %170 {strides = array<i32>} : memref<2x8x32xf32, #tpu.memory_space<vmem>>, vector<1x4x32xf32>,
      %c1_79 = arith.constant 1 : index
      %c0_80 = arith.constant 0 : index
      %c0_81 = arith.constant 0 : index
      %171 = vector.load %arg2[%c1_79, %c0_80, %c0_81] : memref<2x4x192xf32, #tpu.memory_space<vmem>>, vector<1x4x192xf32>
      %172 = vector.shape_cast %171 : vector<1x4x192xf32> to vector<4x192xf32>
      %c0_82 = arith.constant 0 : index
      %c0_83 = arith.constant 0 : index
      %173 = vector.load %arg3[%c0_82, %c0_83] : memref<192x32xf32, #tpu.memory_space<vmem>>, vector<192x32xf32>
      %cst_84 = arith.constant dense<0.000000e+00> : vector<4x32xf32>
      %174 = tpu.matmul %172, %173, %cst_84 {dimension_numbers = #tpu.dot_dimension_numbers<[1], [0], [0], [1], [0, 0, 1, 1], [], []>} : vector<4x192xf32>, vector<192x32xf32>, vector<4x32xf32> -> vector<4x32xf32>
      %c1_85 = arith.constant 1 : index
      %c0_86 = arith.constant 0 : index
      %c0_87 = arith.constant 0 : index
      %175 = vector.load %arg14[%c1_85, %c0_86, %c0_87] : memref<2x8x32xf32, #tpu.memory_space<vmem>>, vector<1x1x32xf32>
      %176 = vector.shape_cast %175 : vector<1x1x32xf32> to vector<1x32xf32>
      %177 = vector.shape_cast %158 : vector<1x32xf32> to vector<1x1x32xf32>
      tpu.vector_store %arg14[%c1_85, %c0_86, %c0_87], %177 {strides = array<i32>} : memref<2x8x32xf32, #tpu.memory_space<vmem>>, vector<1x1x32xf32>,
      %c1_88 = arith.constant 1 : index
      %c0_89 = arith.constant 0 : index
      %178 = vector.load %arg5[%c1_88, %c0_89] : memref<5x32xf32, #tpu.memory_space<vmem>>, vector<4x32xf32>
      %179 = arith.addf %174, %178 : vector<4x32xf32>
      %c1_90 = arith.constant 1 : index
      %c1_91 = arith.constant 1 : index
      %c0_92 = arith.constant 0 : index
      %180 = vector.load %arg14[%c1_90, %c1_91, %c0_92] : memref<2x8x32xf32, #tpu.memory_space<vmem>>, vector<1x4x32xf32>
      %181 = vector.shape_cast %180 : vector<1x4x32xf32> to vector<4x32xf32>
      %182 = vector.shape_cast %179 : vector<4x32xf32> to vector<1x4x32xf32>
      tpu.vector_store %arg14[%c1_90, %c1_91, %c0_92], %182 {strides = array<i32>} : memref<2x8x32xf32, #tpu.memory_space<vmem>>, vector<1x4x32xf32>,
      %c0_93 = arith.constant 0 : index
      %c0_94 = arith.constant 0 : index
      %c0_95 = arith.constant 0 : index
      %183 = vector.load %arg14[%c0_93, %c0_94, %c0_95] : memref<2x8x32xf32, #tpu.memory_space<vmem>>, vector<2x8x32xf32>
      %c0_96 = arith.constant 0 : index
      %c0_97 = arith.constant 0 : index
      %184 = vector.load %arg6[%c0_96, %c0_97] : memref<1x32xf32, #tpu.memory_space<vmem>>, vector<1x32xf32>
      %c0_98 = arith.constant 0 : index
      %c0_99 = arith.constant 0 : index
      %185 = vector.load %arg7[%c0_98, %c0_99] : memref<1x32xf32, #tpu.memory_space<vmem>>, vector<1x32xf32>
      %cst_100 = arith.constant dense<0.000000e+00> : vector<2x8xf32>
      %186 = vector.multi_reduction <add>, %183, %cst_100 [2] : vector<2x8x32xf32> to vector<2x8xf32>
      %187 = vector.shape_cast %186 : vector<2x8xf32> to vector<2x8x1xf32>
      %cst_101 = arith.constant 3.200000e+01 : f32
      %188 = vector.broadcast %cst_101 : f32 to vector<2x8x1xf32>
      %189 = arith.divf %187, %188 : vector<2x8x1xf32>
      %190 = vector.broadcast %189 : vector<2x8x1xf32> to vector<2x8x32xf32>
      %191 = arith.subf %183, %190 : vector<2x8x32xf32>
      %192 = arith.mulf %191, %191 : vector<2x8x32xf32>
      %cst_102 = arith.constant dense<0.000000e+00> : vector<2x8xf32>
      %193 = vector.multi_reduction <add>, %192, %cst_102 [2] : vector<2x8x32xf32> to vector<2x8xf32>
      %194 = vector.shape_cast %193 : vector<2x8xf32> to vector<2x8x1xf32>
      %cst_103 = arith.constant 3.200000e+01 : f32
      %195 = vector.broadcast %cst_103 : f32 to vector<2x8x1xf32>
      %196 = arith.divf %194, %195 : vector<2x8x1xf32>
      %cst_104 = arith.constant 9.99999974E-6 : f32
      %197 = vector.broadcast %cst_104 : f32 to vector<2x8x1xf32>
      %198 = arith.addf %196, %197 : vector<2x8x1xf32>
      %199 = math.rsqrt %198 : vector<2x8x1xf32>
      %200 = vector.broadcast %199 : vector<2x8x1xf32> to vector<2x8x32xf32>
      %201 = arith.mulf %191, %200 : vector<2x8x32xf32>
      %202 = vector.shape_cast %184 : vector<1x32xf32> to vector<1x1x32xf32>
      %203 = vector.broadcast %202 : vector<1x1x32xf32> to vector<2x8x32xf32>
      %204 = arith.mulf %201, %203 : vector<2x8x32xf32>
      %205 = vector.shape_cast %185 : vector<1x32xf32> to vector<1x1x32xf32>
      %206 = vector.broadcast %205 : vector<1x1x32xf32> to vector<2x8x32xf32>
      %207 = arith.addf %204, %206 : vector<2x8x32xf32>
      %c0_105 = arith.constant 0 : index
      %c0_106 = arith.constant 0 : index
      %c0_107 = arith.constant 0 : index
      %208 = vector.load %arg14[%c0_105, %c0_106, %c0_107] : memref<2x8x32xf32, #tpu.memory_space<vmem>>, vector<2x8x32xf32>
      tpu.vector_store %arg14[%c0_105, %c0_106, %c0_107], %207 {strides = array<i32>} : memref<2x8x32xf32, #tpu.memory_space<vmem>>, vector<2x8x32xf32>,
    } else {
    }
    %c0 = arith.constant 0 : index
    %c0_1 = arith.constant 0 : index
    %c0_2 = arith.constant 0 : index
    %3 = vector.load %arg14[%c0, %c0_1, %c0_2] : memref<2x8x32xf32, #tpu.memory_space<vmem>>, vector<2x8x32xf32>
    %c0_3 = arith.constant 0 : index
    %c0_4 = arith.constant 0 : index
    %c0_5 = arith.constant 0 : index
    %4 = vector.load %arg8[%c0_3, %c0_4, %c0_5] : memref<1x8x128xf32, #tpu.memory_space<vmem>>, vector<1x1x32xf32>
    %5 = vector.shape_cast %4 : vector<1x1x32xf32> to vector<1x32xf32>
    %c0_6 = arith.constant 0 : index
    %c1 = arith.constant 1 : index
    %c0_7 = arith.constant 0 : index
    %6 = vector.load %arg8[%c0_6, %c1, %c0_7] : memref<1x8x128xf32, #tpu.memory_space<vmem>>, vector<1x1x32xf32>
    %7 = vector.shape_cast %6 : vector<1x1x32xf32> to vector<1x32xf32>
    %c0_8 = arith.constant 0 : index
    %c2 = arith.constant 2 : index
    %c0_9 = arith.constant 0 : index
    %8 = vector.load %arg8[%c0_8, %c2, %c0_9] : memref<1x8x128xf32, #tpu.memory_space<vmem>>, vector<1x1x32xf32>
    %9 = vector.shape_cast %8 : vector<1x1x32xf32> to vector<1x32xf32>
    %c0_10 = arith.constant 0 : index
    %c3 = arith.constant 3 : index
    %c0_11 = arith.constant 0 : index
    %10 = vector.load %arg8[%c0_10, %c3, %c0_11] : memref<1x8x128xf32, #tpu.memory_space<vmem>>, vector<1x1x32xf32>
    %11 = vector.shape_cast %10 : vector<1x1x32xf32> to vector<1x32xf32>
    %c0_12 = arith.constant 0 : index
    %c4 = arith.constant 4 : index
    %c0_13 = arith.constant 0 : index
    %12 = vector.load %arg8[%c0_12, %c4, %c0_13] : memref<1x8x128xf32, #tpu.memory_space<vmem>>, vector<1x1x32xf32>
    %13 = vector.shape_cast %12 : vector<1x1x32xf32> to vector<1x32xf32>
    %c0_14 = arith.constant 0 : index
    %c5 = arith.constant 5 : index
    %c0_15 = arith.constant 0 : index
    %14 = vector.load %arg8[%c0_14, %c5, %c0_15] : memref<1x8x128xf32, #tpu.memory_space<vmem>>, vector<1x1x32xf32>
    %15 = vector.shape_cast %14 : vector<1x1x32xf32> to vector<1x32xf32>
    %c0_16 = arith.constant 0 : index
    %c6 = arith.constant 6 : index
    %c0_17 = arith.constant 0 : index
    %16 = vector.load %arg8[%c0_16, %c6, %c0_17] : memref<1x8x128xf32, #tpu.memory_space<vmem>>, vector<1x1x96xf32>
    %17 = vector.shape_cast %16 : vector<1x1x96xf32> to vector<1x96xf32>
    %c0_18 = arith.constant 0 : index
    %c7 = arith.constant 7 : index
    %c0_19 = arith.constant 0 : index
    %18 = vector.load %arg8[%c0_18, %c7, %c0_19] : memref<1x8x128xf32, #tpu.memory_space<vmem>>, vector<1x1x64xf32>
    %19 = vector.shape_cast %18 : vector<1x1x64xf32> to vector<1x64xf32>
    %cst = arith.constant dense<0.000000e+00> : vector<2x8xf32>
    %20 = vector.multi_reduction <add>, %3, %cst [2] : vector<2x8x32xf32> to vector<2x8xf32>
    %21 = vector.shape_cast %20 : vector<2x8xf32> to vector<2x8x1xf32>
    %cst_20 = arith.constant 3.200000e+01 : f32
    %22 = vector.broadcast %cst_20 : f32 to vector<2x8x1xf32>
    %23 = arith.divf %21, %22 : vector<2x8x1xf32>
    %24 = vector.broadcast %23 : vector<2x8x1xf32> to vector<2x8x32xf32>
    %25 = arith.subf %3, %24 : vector<2x8x32xf32>
    %26 = arith.mulf %25, %25 : vector<2x8x32xf32>
    %cst_21 = arith.constant dense<0.000000e+00> : vector<2x8xf32>
    %27 = vector.multi_reduction <add>, %26, %cst_21 [2] : vector<2x8x32xf32> to vector<2x8xf32>
    %28 = vector.shape_cast %27 : vector<2x8xf32> to vector<2x8x1xf32>
    %cst_22 = arith.constant 3.200000e+01 : f32
    %29 = vector.broadcast %cst_22 : f32 to vector<2x8x1xf32>
    %30 = arith.divf %28, %29 : vector<2x8x1xf32>
    %cst_23 = arith.constant 9.99999974E-6 : f32
    %31 = vector.broadcast %cst_23 : f32 to vector<2x8x1xf32>
    %32 = arith.addf %30, %31 : vector<2x8x1xf32>
    %33 = math.rsqrt %32 : vector<2x8x1xf32>
    %34 = vector.broadcast %33 : vector<2x8x1xf32> to vector<2x8x32xf32>
    %35 = arith.mulf %25, %34 : vector<2x8x32xf32>
    %36 = vector.shape_cast %5 : vector<1x32xf32> to vector<1x1x32xf32>
    %37 = vector.broadcast %36 : vector<1x1x32xf32> to vector<2x8x32xf32>
    %38 = arith.mulf %35, %37 : vector<2x8x32xf32>
    %39 = vector.shape_cast %7 : vector<1x32xf32> to vector<1x1x32xf32>
    %40 = vector.broadcast %39 : vector<1x1x32xf32> to vector<2x8x32xf32>
    %41 = arith.addf %38, %40 : vector<2x8x32xf32>
    %42 = arith.truncf %41 : vector<2x8x32xf32> to vector<2x8x32xbf16>
    %43 = vector.shape_cast %42 : vector<2x8x32xbf16> to vector<16x32xbf16>
    %c0_24 = arith.constant 0 : index
    %c0_25 = arith.constant 0 : index
    %c0_26 = arith.constant 0 : index
    %44 = vector.load %arg9[%c0_24, %c0_25, %c0_26] : memref<1x32x96xbf16, #tpu.memory_space<vmem>>, vector<1x32x96xbf16>
    %45 = vector.shape_cast %44 : vector<1x32x96xbf16> to vector<32x96xbf16>
    %cst_27 = arith.constant dense<0.000000e+00> : vector<16x96xf32>
    %46 = tpu.matmul %43, %45, %cst_27 {dimension_numbers = #tpu.dot_dimension_numbers<[1], [0], [0], [1], [0, 0, 1, 1], [], []>} : vector<16x32xbf16>, vector<32x96xbf16>, vector<16x96xf32> -> vector<16x96xf32>
    %47 = vector.broadcast %17 : vector<1x96xf32> to vector<16x96xf32>
    %48 = arith.addf %46, %47 : vector<16x96xf32>
    %49 = vector.shape_cast %48 : vector<16x96xf32> to vector<2x8x96xf32>
    %50 = vector.extract_strided_slice %49 {offsets = [0, 0, 0], sizes = [2, 8, 8], strides = [1, 1, 1]} : vector<2x8x96xf32> to vector<2x8x8xf32>
    %51 = vector.extract_strided_slice %49 {offsets = [0, 0, 8], sizes = [2, 8, 8], strides = [1, 1, 1]} : vector<2x8x96xf32> to vector<2x8x8xf32>
    %52 = vector.extract_strided_slice %49 {offsets = [0, 0, 16], sizes = [2, 8, 8], strides = [1, 1, 1]} : vector<2x8x96xf32> to vector<2x8x8xf32>
    %53 = vector.extract_strided_slice %49 {offsets = [0, 0, 24], sizes = [2, 8, 8], strides = [1, 1, 1]} : vector<2x8x96xf32> to vector<2x8x8xf32>
    %54 = tpu.concatenate %50, %51, %52, %53 in 0 : vector<2x8x8xf32>, vector<2x8x8xf32>, vector<2x8x8xf32>, vector<2x8x8xf32> -> vector<8x8x8xf32>
    %55 = vector.extract_strided_slice %49 {offsets = [0, 0, 32], sizes = [2, 8, 8], strides = [1, 1, 1]} : vector<2x8x96xf32> to vector<2x8x8xf32>
    %56 = vector.extract_strided_slice %49 {offsets = [0, 0, 40], sizes = [2, 8, 8], strides = [1, 1, 1]} : vector<2x8x96xf32> to vector<2x8x8xf32>
    %57 = vector.extract_strided_slice %49 {offsets = [0, 0, 48], sizes = [2, 8, 8], strides = [1, 1, 1]} : vector<2x8x96xf32> to vector<2x8x8xf32>
    %58 = vector.extract_strided_slice %49 {offsets = [0, 0, 56], sizes = [2, 8, 8], strides = [1, 1, 1]} : vector<2x8x96xf32> to vector<2x8x8xf32>
    %59 = tpu.concatenate %55, %56, %57, %58 in 0 : vector<2x8x8xf32>, vector<2x8x8xf32>, vector<2x8x8xf32>, vector<2x8x8xf32> -> vector<8x8x8xf32>
    %60 = vector.extract_strided_slice %49 {offsets = [0, 0, 64], sizes = [2, 8, 8], strides = [1, 1, 1]} : vector<2x8x96xf32> to vector<2x8x8xf32>
    %61 = vector.extract_strided_slice %49 {offsets = [0, 0, 72], sizes = [2, 8, 8], strides = [1, 1, 1]} : vector<2x8x96xf32> to vector<2x8x8xf32>
    %62 = vector.extract_strided_slice %49 {offsets = [0, 0, 80], sizes = [2, 8, 8], strides = [1, 1, 1]} : vector<2x8x96xf32> to vector<2x8x8xf32>
    %63 = vector.extract_strided_slice %49 {offsets = [0, 0, 88], sizes = [2, 8, 8], strides = [1, 1, 1]} : vector<2x8x96xf32> to vector<2x8x8xf32>
    %64 = tpu.concatenate %60, %61, %62, %63 in 0 : vector<2x8x8xf32>, vector<2x8x8xf32>, vector<2x8x8xf32>, vector<2x8x8xf32> -> vector<8x8x8xf32>
    %cst_28 = arith.constant 0.353553385 : f32
    %65 = vector.broadcast %cst_28 : f32 to vector<8x8x8xf32>
    %66 = arith.mulf %54, %65 : vector<8x8x8xf32>
    %67 = arith.truncf %66 : vector<8x8x8xf32> to vector<8x8x8xbf16>
    %68 = arith.truncf %59 : vector<8x8x8xf32> to vector<8x8x8xbf16>
    %69 = arith.truncf %64 : vector<8x8x8xf32> to vector<8x8x8xbf16>
    %cst_29 = arith.constant dense<0.000000e+00> : vector<8x8x8xf32>
    %70 = tpu.matmul %67, %68, %cst_29 {dimension_numbers = #tpu.dot_dimension_numbers<[2], [2], [1], [1], [0, 0, 0, 1, 1, 1], [0], [0]>} : vector<8x8x8xbf16>, vector<8x8x8xbf16>, vector<8x8x8xf32> -> vector<8x8x8xf32>
    %71 = tpu.iota {dimensions = array<i32: 1>} : vector<8x8xi32>
    %c5_i32 = arith.constant 5 : i32
    %72 = vector.broadcast %c5_i32 : i32 to vector<8x8xi32>
    %73 = arith.cmpi slt, %71, %72 : vector<8x8xi32>
    %74 = vector.shape_cast %73 : vector<8x8xi1> to vector<1x8x8xi1>
    %cst_30 = arith.constant -1.000000e+30 : f32
    %75 = vector.shape_cast %74 : vector<1x8x8xi1> to vector<1x8x8xi1>
    %76 = vector.broadcast %75 : vector<1x8x8xi1> to vector<8x8x8xi1>
    %77 = vector.broadcast %cst_30 : f32 to vector<8x8x8xf32>
    %78 = arith.select %76, %70, %77 : vector<8x8x8xi1>, vector<8x8x8xf32>
    %cst_31 = arith.constant dense<0xFF800000> : vector<8x8xf32>
    %79 = vector.multi_reduction <maximumf>, %78, %cst_31 [2] : vector<8x8x8xf32> to vector<8x8xf32>
    %80 = vector.shape_cast %79 : vector<8x8xf32> to vector<8x8x1xf32>
    %81 = vector.broadcast %80 : vector<8x8x1xf32> to vector<8x8x8xf32>
    %82 = arith.subf %78, %81 : vector<8x8x8xf32>
    %83 = math.exp %82 : vector<8x8x8xf32>
    %cst_32 = arith.constant dense<0.000000e+00> : vector<8x8xf32>
    %84 = vector.multi_reduction <add>, %83, %cst_32 [2] : vector<8x8x8xf32> to vector<8x8xf32>
    %85 = vector.shape_cast %84 : vector<8x8xf32> to vector<8x8x1xf32>
    %86 = tpu.reciprocal %85 {approx = true} : vector<8x8x1xf32> -> vector<8x8x1xf32>
    %87 = vector.broadcast %86 : vector<8x8x1xf32> to vector<8x8x8xf32>
    %88 = arith.mulf %83, %87 : vector<8x8x8xf32>
    %89 = arith.truncf %88 : vector<8x8x8xf32> to vector<8x8x8xbf16>
    %cst_33 = arith.constant dense<0.000000e+00> : vector<8x8x8xf32>
    %90 = tpu.matmul %89, %69, %cst_33 {dimension_numbers = #tpu.dot_dimension_numbers<[2], [1], [1], [2], [0, 0, 0, 1, 1, 2], [0], [0]>} : vector<8x8x8xbf16>, vector<8x8x8xbf16>, vector<8x8x8xf32> -> vector<8x8x8xf32>
    %91 = vector.extract_strided_slice %90 {offsets = [0, 0, 0], sizes = [2, 8, 8], strides = [1, 1, 1]} : vector<8x8x8xf32> to vector<2x8x8xf32>
    %92 = vector.extract_strided_slice %90 {offsets = [2, 0, 0], sizes = [2, 8, 8], strides = [1, 1, 1]} : vector<8x8x8xf32> to vector<2x8x8xf32>
    %93 = vector.extract_strided_slice %90 {offsets = [4, 0, 0], sizes = [2, 8, 8], strides = [1, 1, 1]} : vector<8x8x8xf32> to vector<2x8x8xf32>
    %94 = vector.extract_strided_slice %90 {offsets = [6, 0, 0], sizes = [2, 8, 8], strides = [1, 1, 1]} : vector<8x8x8xf32> to vector<2x8x8xf32>
    %95 = tpu.concatenate %91, %92, %93, %94 in 2 : vector<2x8x8xf32>, vector<2x8x8xf32>, vector<2x8x8xf32>, vector<2x8x8xf32> -> vector<2x8x32xf32>
    %96 = vector.shape_cast %95 : vector<2x8x32xf32> to vector<16x32xf32>
    %97 = arith.truncf %96 : vector<16x32xf32> to vector<16x32xbf16>
    %c0_34 = arith.constant 0 : index
    %c0_35 = arith.constant 0 : index
    %c0_36 = arith.constant 0 : index
    %98 = vector.load %arg10[%c0_34, %c0_35, %c0_36] : memref<1x32x32xbf16, #tpu.memory_space<vmem>>, vector<1x32x32xbf16>
    %99 = vector.shape_cast %98 : vector<1x32x32xbf16> to vector<32x32xbf16>
    %cst_37 = arith.constant dense<0.000000e+00> : vector<16x32xf32>
    %100 = tpu.matmul %97, %99, %cst_37 {dimension_numbers = #tpu.dot_dimension_numbers<[1], [0], [0], [1], [0, 0, 1, 1], [], []>} : vector<16x32xbf16>, vector<32x32xbf16>, vector<16x32xf32> -> vector<16x32xf32>
    %101 = vector.broadcast %13 : vector<1x32xf32> to vector<16x32xf32>
    %102 = arith.addf %100, %101 : vector<16x32xf32>
    %103 = vector.shape_cast %102 : vector<16x32xf32> to vector<2x8x32xf32>
    %104 = arith.addf %3, %103 : vector<2x8x32xf32>
    %cst_38 = arith.constant dense<0.000000e+00> : vector<2x8xf32>
    %105 = vector.multi_reduction <add>, %104, %cst_38 [2] : vector<2x8x32xf32> to vector<2x8xf32>
    %106 = vector.shape_cast %105 : vector<2x8xf32> to vector<2x8x1xf32>
    %cst_39 = arith.constant 3.200000e+01 : f32
    %107 = vector.broadcast %cst_39 : f32 to vector<2x8x1xf32>
    %108 = arith.divf %106, %107 : vector<2x8x1xf32>
    %109 = vector.broadcast %108 : vector<2x8x1xf32> to vector<2x8x32xf32>
    %110 = arith.subf %104, %109 : vector<2x8x32xf32>
    %111 = arith.mulf %110, %110 : vector<2x8x32xf32>
    %cst_40 = arith.constant dense<0.000000e+00> : vector<2x8xf32>
    %112 = vector.multi_reduction <add>, %111, %cst_40 [2] : vector<2x8x32xf32> to vector<2x8xf32>
    %113 = vector.shape_cast %112 : vector<2x8xf32> to vector<2x8x1xf32>
    %cst_41 = arith.constant 3.200000e+01 : f32
    %114 = vector.broadcast %cst_41 : f32 to vector<2x8x1xf32>
    %115 = arith.divf %113, %114 : vector<2x8x1xf32>
    %cst_42 = arith.constant 9.99999974E-6 : f32
    %116 = vector.broadcast %cst_42 : f32 to vector<2x8x1xf32>
    %117 = arith.addf %115, %116 : vector<2x8x1xf32>
    %118 = math.rsqrt %117 : vector<2x8x1xf32>
    %119 = vector.broadcast %118 : vector<2x8x1xf32> to vector<2x8x32xf32>
    %120 = arith.mulf %110, %119 : vector<2x8x32xf32>
    %121 = vector.shape_cast %9 : vector<1x32xf32> to vector<1x1x32xf32>
    %122 = vector.broadcast %121 : vector<1x1x32xf32> to vector<2x8x32xf32>
    %123 = arith.mulf %120, %122 : vector<2x8x32xf32>
    %124 = vector.shape_cast %11 : vector<1x32xf32> to vector<1x1x32xf32>
    %125 = vector.broadcast %124 : vector<1x1x32xf32> to vector<2x8x32xf32>
    %126 = arith.addf %123, %125 : vector<2x8x32xf32>
    %127 = arith.truncf %126 : vector<2x8x32xf32> to vector<2x8x32xbf16>
    %128 = vector.shape_cast %127 : vector<2x8x32xbf16> to vector<16x32xbf16>
    %c0_43 = arith.constant 0 : index
    %c0_44 = arith.constant 0 : index
    %c0_45 = arith.constant 0 : index
    %129 = vector.load %arg11[%c0_43, %c0_44, %c0_45] : memref<1x32x64xbf16, #tpu.memory_space<vmem>>, vector<1x32x64xbf16>
    %130 = vector.shape_cast %129 : vector<1x32x64xbf16> to vector<32x64xbf16>
    %cst_46 = arith.constant dense<0.000000e+00> : vector<16x64xf32>
    %131 = tpu.matmul %128, %130, %cst_46 {dimension_numbers = #tpu.dot_dimension_numbers<[1], [0], [0], [1], [0, 0, 1, 1], [], []>} : vector<16x32xbf16>, vector<32x64xbf16>, vector<16x64xf32> -> vector<16x64xf32>
    %132 = vector.broadcast %19 : vector<1x64xf32> to vector<16x64xf32>
    %133 = arith.addf %131, %132 : vector<16x64xf32>
    %cst_47 = arith.constant 1.702000e+00 : f32
    %134 = vector.broadcast %cst_47 : f32 to vector<16x64xf32>
    %135 = arith.mulf %134, %133 : vector<16x64xf32>
    %136 = arith.negf %135 : vector<16x64xf32>
    %137 = math.exp %136 : vector<16x64xf32>
    %cst_48 = arith.constant 1.000000e+00 : f32
    %138 = vector.broadcast %cst_48 : f32 to vector<16x64xf32>
    %139 = arith.addf %138, %137 : vector<16x64xf32>
    %140 = arith.divf %138, %139 : vector<16x64xf32>
    %141 = arith.mulf %133, %140 : vector<16x64xf32>
    %142 = arith.truncf %141 : vector<16x64xf32> to vector<16x64xbf16>
    %c0_49 = arith.constant 0 : index
    %c0_50 = arith.constant 0 : index
    %c0_51 = arith.constant 0 : index
    %143 = vector.load %arg12[%c0_49, %c0_50, %c0_51] : memref<1x64x32xbf16, #tpu.memory_space<vmem>>, vector<1x64x32xbf16>
    %144 = vector.shape_cast %143 : vector<1x64x32xbf16> to vector<64x32xbf16>
    %cst_52 = arith.constant dense<0.000000e+00> : vector<16x32xf32>
    %145 = tpu.matmul %142, %144, %cst_52 {dimension_numbers = #tpu.dot_dimension_numbers<[1], [0], [0], [1], [0, 0, 1, 1], [], []>} : vector<16x64xbf16>, vector<64x32xbf16>, vector<16x32xf32> -> vector<16x32xf32>
    %146 = vector.broadcast %15 : vector<1x32xf32> to vector<16x32xf32>
    %147 = arith.addf %145, %146 : vector<16x32xf32>
    %148 = vector.shape_cast %147 : vector<16x32xf32> to vector<2x8x32xf32>
    %149 = arith.addf %104, %148 : vector<2x8x32xf32>
    %c0_53 = arith.constant 0 : index
    %c0_54 = arith.constant 0 : index
    %c0_55 = arith.constant 0 : index
    %150 = vector.load %arg14[%c0_53, %c0_54, %c0_55] : memref<2x8x32xf32, #tpu.memory_space<vmem>>, vector<2x8x32xf32>
    tpu.vector_store %arg14[%c0_53, %c0_54, %c0_55], %149 {strides = array<i32>} : memref<2x8x32xf32, #tpu.memory_space<vmem>>, vector<2x8x32xf32>,
    %c1_i32 = arith.constant 1 : i32
    %151 = arith.cmpi eq, %arg1, %c1_i32 : i32
    %152 = arith.extui %151 : i1 to i32
    %c0_i32_56 = arith.constant 0 : i32
    %153 = arith.cmpi ne, %152, %c0_i32_56 : i32
    scf.if %153 {
      %154 = vector.extract_strided_slice %149 {offsets = [0, 1, 0], sizes = [2, 4, 32], strides = [1, 1, 1]} : vector<2x8x32xf32> to vector<2x4x32xf32>
      %c0_57 = arith.constant 0 : index
      %c0_58 = arith.constant 0 : index
      %c0_59 = arith.constant 0 : index
      %155 = vector.load %arg13[%c0_57, %c0_58, %c0_59] : memref<2x4x32xf32, #tpu.memory_space<vmem>>, vector<2x4x32xf32>
      tpu.vector_store %arg13[%c0_57, %c0_58, %c0_59], %154 {strides = array<i32>} : memref<2x4x32xf32, #tpu.memory_space<vmem>>, vector<2x4x32xf32>,
    } else {
    }
    return
  }
  func.func @transform_0(%arg0: i32, %arg1: i32) -> (i32, i32, i32) {
    %c0_i32 = arith.constant 0 : i32
    %c0_i32_0 = arith.constant 0 : i32
    %c0_i32_1 = arith.constant 0 : i32
    return %arg0, %c0_i32, %c0_i32_0 : i32, i32, i32
  }
  func.func @transform_1(%arg0: i32, %arg1: i32) -> (i32, i32) {
    %c0_i32 = arith.constant 0 : i32
    %c0_i32_0 = arith.constant 0 : i32
    %c0_i32_1 = arith.constant 0 : i32
    return %c0_i32, %c0_i32_0 : i32, i32
  }
  func.func @transform_2(%arg0: i32, %arg1: i32) -> (i32, i32) {
    %c0_i32 = arith.constant 0 : i32
    %c0_i32_0 = arith.constant 0 : i32
    %c0_i32_1 = arith.constant 0 : i32
    return %c0_i32, %c0_i32_0 : i32, i32
  }
  func.func @transform_3(%arg0: i32, %arg1: i32) -> (i32, i32) {
    %c0_i32 = arith.constant 0 : i32
    %c0_i32_0 = arith.constant 0 : i32
    %c0_i32_1 = arith.constant 0 : i32
    return %c0_i32, %c0_i32_0 : i32, i32
  }
  func.func @transform_4(%arg0: i32, %arg1: i32) -> (i32, i32) {
    %c0_i32 = arith.constant 0 : i32
    %c0_i32_0 = arith.constant 0 : i32
    %c0_i32_1 = arith.constant 0 : i32
    return %c0_i32, %c0_i32_0 : i32, i32
  }
  func.func @transform_5(%arg0: i32, %arg1: i32) -> (i32, i32) {
    %c0_i32 = arith.constant 0 : i32
    %c0_i32_0 = arith.constant 0 : i32
    %c0_i32_1 = arith.constant 0 : i32
    return %c0_i32, %c0_i32_0 : i32, i32
  }
  func.func @transform_6(%arg0: i32, %arg1: i32) -> (i32, i32, i32) {
    %c0_i32 = arith.constant 0 : i32
    %c0_i32_0 = arith.constant 0 : i32
    %c0_i32_1 = arith.constant 0 : i32
    return %arg1, %c0_i32, %c0_i32_0 : i32, i32, i32
  }
  func.func @transform_7(%arg0: i32, %arg1: i32) -> (i32, i32, i32) {
    %c0_i32 = arith.constant 0 : i32
    %c0_i32_0 = arith.constant 0 : i32
    %c0_i32_1 = arith.constant 0 : i32
    return %arg1, %c0_i32, %c0_i32_0 : i32, i32, i32
  }
  func.func @transform_8(%arg0: i32, %arg1: i32) -> (i32, i32, i32) {
    %c0_i32 = arith.constant 0 : i32
    %c0_i32_0 = arith.constant 0 : i32
    %c0_i32_1 = arith.constant 0 : i32
    return %arg1, %c0_i32, %c0_i32_0 : i32, i32, i32
  }
  func.func @transform_9(%arg0: i32, %arg1: i32) -> (i32, i32, i32) {
    %c0_i32 = arith.constant 0 : i32
    %c0_i32_0 = arith.constant 0 : i32
    %c0_i32_1 = arith.constant 0 : i32
    return %arg1, %c0_i32, %c0_i32_0 : i32, i32, i32
  }
  func.func @transform_10(%arg0: i32, %arg1: i32) -> (i32, i32, i32) {
    %c0_i32 = arith.constant 0 : i32
    %c0_i32_0 = arith.constant 0 : i32
    %c0_i32_1 = arith.constant 0 : i32
    return %arg1, %c0_i32, %c0_i32_0 : i32, i32, i32
  }
  func.func @transform_11(%arg0: i32, %arg1: i32) -> (i32, i32, i32) {
    %c0_i32 = arith.constant 0 : i32
    %c0_i32_0 = arith.constant 0 : i32
    %c0_i32_1 = arith.constant 0 : i32
    return %arg0, %c0_i32, %c0_i32_0 : i32, i32, i32
  }
}

</mosaic_0001>

<llo_original>
// kernel: tpu_custom_call.1
$region0: #{tpu_custom_call.1}
  #allocation0 [shape = 'u32[]', space=smem, size = 0x4, offset = 0x4, fixed_abs, tag = 'smem constant byte address 0x4 - core index']
  #allocation1 [shape = 'u32[144,128]{1,0:T(1,128)}', space=vmem, size = 0x12000, scoped, tag = 'internal scratch']
  #allocation2 [shape = 'f32[2,8,32]{2,1,0:T(8,128)}', space=vmem, size = 0x2000, scoped, tag = 'scratch operand']
  %s0 = inlined_call_operand.vmem [shape: f32[2,4,192], index: 0, kind: input, shape index: {}]
  %s1 = inlined_call_operand.vmem [shape: f32[192,32], index: 1, kind: input, shape index: {}]
  %s2 = inlined_call_operand.vmem [shape: f32[1,32], index: 2, kind: input, shape index: {}]
  %s3 = inlined_call_operand.vmem [shape: f32[5,32], index: 3, kind: input, shape index: {}]
  %s4 = inlined_call_operand.vmem [shape: f32[1,32], index: 4, kind: input, shape index: {}]
  %s5 = inlined_call_operand.vmem [shape: f32[1,32], index: 5, kind: input, shape index: {}]
  %s6 = inlined_call_operand.vmem [shape: f32[2,8,128], index: 6, kind: input, shape index: {}]
  %s7 = inlined_call_operand.vmem [shape: bf16[2,32,96], index: 7, kind: input, shape index: {}]
  %s8 = inlined_call_operand.vmem [shape: bf16[2,32,32], index: 8, kind: input, shape index: {}]
  %s9 = inlined_call_operand.vmem [shape: bf16[2,32,64], index: 9, kind: input, shape index: {}]
  %s10 = inlined_call_operand.vmem [shape: bf16[2,64,32], index: 10, kind: input, shape index: {}]
  %s11 = inlined_call_operand.hbm [shape: f32[2,4,32], index: 11, kind: output, shape index: {}]
  %s12 = sld [smem:[#allocation0]]
  $region85: #{tpu_custom_call.1} parent=0
    _
  %s14 = ssub.s32 1, %s12
  %s15 = scalar_select 0, %s14, %s12
  $region1: #{tpu_custom_call.1} parent=0
    #allocation3 [shape = 'u8[4096]{0}', space=vmem, size = 0x1000, scoped, tag = 'output window, operand 0, single buffered']
    #allocation4 [shape = 's32[2]{0}', space=sflag, size = 0x8, scoped, tag = 'scoped memory for tpu_custom_call.1']
    %16 = vsyncpa [#allocation4], 0
    loop: start=0, step=1, limit=4
    $region2: #{tpu_custom_call.1} parent=1 // loop_pre_header
      _
    $region3: #{tpu_custom_call.1} parent=1 // loop_header
      %s18 = sphi 0, %s22
      %p19 = scmp.ge.s32.totalorder %s18, 4
      %s25 = sphi 0, %s37
      %s26 = sphi 0, %s33
      %s27 = sphi 0, %s25
      %s28 = sphi 0, %s26
      %s29 = sphi 0, %s27
      %s30 = sphi 0, %s28
      %s40 = sphi 0, %s42
      %s43 = sphi 0, %s40
      %s44 = sphi 0, %s43
      %s60 = sphi 0, %s44
      %s64 = sphi 0, %s64
      %s66 = sphi 0, %s64
      %s67 = sphi 0, %s66
      %s81 = sphi 0, %s67
      %s85 = sphi 0, %s85
      %s87 = sphi 0, %s85
      %s88 = sphi 0, %s87
      %s102 = sphi 0, %s88
      %s106 = sphi 0, %s106
      %s108 = sphi 0, %s106
      %s109 = sphi 0, %s108
      %s123 = sphi 0, %s109
      %s127 = sphi 0, %s127
      %s129 = sphi 0, %s127
      %s130 = sphi 0, %s129
      %s144 = sphi 0, %s130
      %s148 = sphi 0, %s148
      %s150 = sphi 0, %s148
      %s151 = sphi 0, %s150
      %s165 = sphi 0, %s151
      %s171 = sphi 0, %s173
      %s174 = sphi 0, %s171
      %s175 = sphi 0, %s174
      %s191 = sphi 0, %s175
      %s197 = sphi 0, %s199
      %s200 = sphi 0, %s197
      %s201 = sphi 0, %s200
      %s217 = sphi 0, %s201
      %s223 = sphi 0, %s225
      %s226 = sphi 0, %s223
      %s227 = sphi 0, %s226
      %s243 = sphi 0, %s227
      %s249 = sphi 0, %s251
      %s252 = sphi 0, %s249
      %s253 = sphi 0, %s252
      %s269 = sphi 0, %s253
      %s275 = sphi 0, %s277
      %s278 = sphi 0, %s275
      %s279 = sphi 0, %s278
      %s295 = sphi 0, %s279
      %s301 = sphi 0, %s303
      %s304 = sphi 0, %s301
      %s305 = sphi 0, %s304
      %s321 = sphi 0, %s305
    $region4: #{tpu_custom_call.1} parent=1 // loop_header_branch
      %21 = sbr.rel (%p19) target = $region8
    $region5: #{tpu_custom_call.1} parent=1 // loop_body
      %s23 = ssub.s32 %s18, 1
      %s24 = ssub.s32 %s18, 2
      %s31 = sadd.s32 1, %s26
      %p32 = scmp.ge.s32.totalorder %s31, 2
      %s33 = scalar_select %p32, 0, %s31
      %s34 = sadd.s32 1, %s25
      %s35 = scalar_select %p32, %s34, %s25
      %p36 = scmp.ge.s32.totalorder %s35, 1
      %s37 = scalar_select %p36, 0, %s35
      %s38 = ssub.s32 %s25, %s37
      %p39 = scmp.eq.s32.totalorder %s38, 0
      %s41 = sadd.s32 %s40, 1
      %s42 = scalar_select %p39, %s40, %s41
      %p45 = pneg %p39
      %p46 = scmp.eq.s32.totalorder %s18, 1
      %p47 = por %p45, %p46
      %p48 = scmp.ne.s32.totalorder %s40, %s43
      %p49 = scmp.eq.s32.totalorder %s18, 0
      %p50 = por %p48, %p49
      %p51 = scmp.ne.s32.totalorder %s40, %s43
      %p52 = scmp.eq.s32.totalorder %s23, 1
      %p53 = por %p51, %p52
      %p54 = scmp.ne.s32.totalorder %s43, %s44
      %p55 = scmp.eq.s32.totalorder %s23, 0
      %p56 = por %p54, %p55
      %p57 = scmp.ne.s32.totalorder %s43, %s44
      %p58 = scmp.eq.s32.totalorder %s24, 1
      %p59 = por %p57, %p58
      %p61 = scmp.ne.s32.totalorder %s44, %s60
      %p62 = scmp.eq.s32.totalorder %s24, 0
      %p63 = por %p61, %p62
      %s65 = sadd.s32 %s64, 1
      %p68 = scmp.eq.s32.totalorder %s18, 1
      %p69 = scmp.ne.s32.totalorder %s64, %s66
      %p70 = scmp.eq.s32.totalorder %s18, 0
      %p71 = por %p69, %p70
      %p72 = scmp.ne.s32.totalorder %s64, %s66
      %p73 = scmp.eq.s32.totalorder %s23, 1
      %p74 = por %p72, %p73
      %p75 = scmp.ne.s32.totalorder %s66, %s67
      %p76 = scmp.eq.s32.totalorder %s23, 0
      %p77 = por %p75, %p76
      %p78 = scmp.ne.s32.totalorder %s66, %s67
      %p79 = scmp.eq.s32.totalorder %s24, 1
      %p80 = por %p78, %p79
      %p82 = scmp.ne.s32.totalorder %s67, %s81
      %p83 = scmp.eq.s32.totalorder %s24, 0
      %p84 = por %p82, %p83
      %s86 = sadd.s32 %s85, 1
      %p89 = scmp.eq.s32.totalorder %s18, 1
      %p90 = scmp.ne.s32.totalorder %s85, %s87
      %p91 = scmp.eq.s32.totalorder %s18, 0
      %p92 = por %p90, %p91
      %p93 = scmp.ne.s32.totalorder %s85, %s87
      %p94 = scmp.eq.s32.totalorder %s23, 1
      %p95 = por %p93, %p94
      %p96 = scmp.ne.s32.totalorder %s87, %s88
      %p97 = scmp.eq.s32.totalorder %s23, 0
      %p98 = por %p96, %p97
      %p99 = scmp.ne.s32.totalorder %s87, %s88
      %p100 = scmp.eq.s32.totalorder %s24, 1
      %p101 = por %p99, %p100
      %p103 = scmp.ne.s32.totalorder %s88, %s102
      %p104 = scmp.eq.s32.totalorder %s24, 0
      %p105 = por %p103, %p104
      %s107 = sadd.s32 %s106, 1
      %p110 = scmp.eq.s32.totalorder %s18, 1
      %p111 = scmp.ne.s32.totalorder %s106, %s108
      %p112 = scmp.eq.s32.totalorder %s18, 0
      %p113 = por %p111, %p112
      %p114 = scmp.ne.s32.totalorder %s106, %s108
      %p115 = scmp.eq.s32.totalorder %s23, 1
      %p116 = por %p114, %p115
      %p117 = scmp.ne.s32.totalorder %s108, %s109
      %p118 = scmp.eq.s32.totalorder %s23, 0
      %p119 = por %p117, %p118
      %p120 = scmp.ne.s32.totalorder %s108, %s109
      %p121 = scmp.eq.s32.totalorder %s24, 1
      %p122 = por %p120, %p121
      %p124 = scmp.ne.s32.totalorder %s109, %s123
      %p125 = scmp.eq.s32.totalorder %s24, 0
      %p126 = por %p124, %p125
      %s128 = sadd.s32 %s127, 1
      %p131 = scmp.eq.s32.totalorder %s18, 1
      %p132 = scmp.ne.s32.totalorder %s127, %s129
      %p133 = scmp.eq.s32.totalorder %s18, 0
      %p134 = por %p132, %p133
      %p135 = scmp.ne.s32.totalorder %s127, %s129
      %p136 = scmp.eq.s32.totalorder %s23, 1
      %p137 = por %p135, %p136
      %p138 = scmp.ne.s32.totalorder %s129, %s130
      %p139 = scmp.eq.s32.totalorder %s23, 0
      %p140 = por %p138, %p139
      %p141 = scmp.ne.s32.totalorder %s129, %s130
      %p142 = scmp.eq.s32.totalorder %s24, 1
      %p143 = por %p141, %p142
      %p145 = scmp.ne.s32.totalorder %s130, %s144
      %p146 = scmp.eq.s32.totalorder %s24, 0
      %p147 = por %p145, %p146
      %s149 = sadd.s32 %s148, 1
      %p152 = scmp.eq.s32.totalorder %s18, 1
      %p153 = scmp.ne.s32.totalorder %s148, %s150
      %p154 = scmp.eq.s32.totalorder %s18, 0
      %p155 = por %p153, %p154
      %p156 = scmp.ne.s32.totalorder %s148, %s150
      %p157 = scmp.eq.s32.totalorder %s23, 1
      %p158 = por %p156, %p157
      %p159 = scmp.ne.s32.totalorder %s150, %s151
      %p160 = scmp.eq.s32.totalorder %s23, 0
      %p161 = por %p159, %p160
      %p162 = scmp.ne.s32.totalorder %s150, %s151
      %p163 = scmp.eq.s32.totalorder %s24, 1
      %p164 = por %p162, %p163
      %p166 = scmp.ne.s32.totalorder %s151, %s165
      %p167 = scmp.eq.s32.totalorder %s24, 0
      %p168 = por %p166, %p167
      %s169 = ssub.s32 %s26, %s33
      %p170 = scmp.eq.s32.totalorder %s169, 0
      %s172 = sadd.s32 %s171, 1
      %s173 = scalar_select %p170, %s171, %s172
      %p176 = pneg %p170
      %p177 = scmp.eq.s32.totalorder %s18, 1
      %p178 = por %p176, %p177
      %p179 = scmp.ne.s32.totalorder %s171, %s174
      %p180 = scmp.eq.s32.totalorder %s18, 0
      %p181 = por %p179, %p180
      %p182 = scmp.ne.s32.totalorder %s171, %s174
      %p183 = scmp.eq.s32.totalorder %s23, 1
      %p184 = por %p182, %p183
      %p185 = scmp.ne.s32.totalorder %s174, %s175
      %p186 = scmp.eq.s32.totalorder %s23, 0
      %p187 = por %p185, %p186
      %p188 = scmp.ne.s32.totalorder %s174, %s175
      %p189 = scmp.eq.s32.totalorder %s24, 1
      %p190 = por %p188, %p189
      %p192 = scmp.ne.s32.totalorder %s175, %s191
      %p193 = scmp.eq.s32.totalorder %s24, 0
      %p194 = por %p192, %p193
      %s195 = ssub.s32 %s26, %s33
      %p196 = scmp.eq.s32.totalorder %s195, 0
      %s198 = sadd.s32 %s197, 1
      %s199 = scalar_select %p196, %s197, %s198
      %p202 = pneg %p196
      %p203 = scmp.eq.s32.totalorder %s18, 1
      %p204 = por %p202, %p203
      %p205 = scmp.ne.s32.totalorder %s197, %s200
      %p206 = scmp.eq.s32.totalorder %s18, 0
      %p207 = por %p205, %p206
      %p208 = scmp.ne.s32.totalorder %s197, %s200
      %p209 = scmp.eq.s32.totalorder %s23, 1
      %p210 = por %p208, %p209
      %p211 = scmp.ne.s32.totalorder %s200, %s201
      %p212 = scmp.eq.s32.totalorder %s23, 0
      %p213 = por %p211, %p212
      %p214 = scmp.ne.s32.totalorder %s200, %s201
      %p215 = scmp.eq.s32.totalorder %s24, 1
      %p216 = por %p214, %p215
      %p218 = scmp.ne.s32.totalorder %s201, %s217
      %p219 = scmp.eq.s32.totalorder %s24, 0
      %p220 = por %p218, %p219
      %s221 = ssub.s32 %s26, %s33
      %p222 = scmp.eq.s32.totalorder %s221, 0
      %s224 = sadd.s32 %s223, 1
      %s225 = scalar_select %p222, %s223, %s224
      %p228 = pneg %p222
      %p229 = scmp.eq.s32.totalorder %s18, 1
      %p230 = por %p228, %p229
      %p231 = scmp.ne.s32.totalorder %s223, %s226
      %p232 = scmp.eq.s32.totalorder %s18, 0
      %p233 = por %p231, %p232
      %p234 = scmp.ne.s32.totalorder %s223, %s226
      %p235 = scmp.eq.s32.totalorder %s23, 1
      %p236 = por %p234, %p235
      %p237 = scmp.ne.s32.totalorder %s226, %s227
      %p238 = scmp.eq.s32.totalorder %s23, 0
      %p239 = por %p237, %p238
      %p240 = scmp.ne.s32.totalorder %s226, %s227
      %p241 = scmp.eq.s32.totalorder %s24, 1
      %p242 = por %p240, %p241
      %p244 = scmp.ne.s32.totalorder %s227, %s243
      %p245 = scmp.eq.s32.totalorder %s24, 0
      %p246 = por %p244, %p245
      %s247 = ssub.s32 %s26, %s33
      %p248 = scmp.eq.s32.totalorder %s247, 0
      %s250 = sadd.s32 %s249, 1
      %s251 = scalar_select %p248, %s249, %s250
      %p254 = pneg %p248
      %p255 = scmp.eq.s32.totalorder %s18, 1
      %p256 = por %p254, %p255
      %p257 = scmp.ne.s32.totalorder %s249, %s252
      %p258 = scmp.eq.s32.totalorder %s18, 0
      %p259 = por %p257, %p258
      %p260 = scmp.ne.s32.totalorder %s249, %s252
      %p261 = scmp.eq.s32.totalorder %s23, 1
      %p262 = por %p260, %p261
      %p263 = scmp.ne.s32.totalorder %s252, %s253
      %p264 = scmp.eq.s32.totalorder %s23, 0
      %p265 = por %p263, %p264
      %p266 = scmp.ne.s32.totalorder %s252, %s253
      %p267 = scmp.eq.s32.totalorder %s24, 1
      %p268 = por %p266, %p267
      %p270 = scmp.ne.s32.totalorder %s253, %s269
      %p271 = scmp.eq.s32.totalorder %s24, 0
      %p272 = por %p270, %p271
      %s273 = ssub.s32 %s26, %s33
      %p274 = scmp.eq.s32.totalorder %s273, 0
      %s276 = sadd.s32 %s275, 1
      %s277 = scalar_select %p274, %s275, %s276
      %p280 = pneg %p274
      %p281 = scmp.eq.s32.totalorder %s18, 1
      %p282 = por %p280, %p281
      %p283 = scmp.ne.s32.totalorder %s275, %s278
      %p284 = scmp.eq.s32.totalorder %s18, 0
      %p285 = por %p283, %p284
      %p286 = scmp.ne.s32.totalorder %s275, %s278
      %p287 = scmp.eq.s32.totalorder %s23, 1
      %p288 = por %p286, %p287
      %p289 = scmp.ne.s32.totalorder %s278, %s279
      %p290 = scmp.eq.s32.totalorder %s23, 0
      %p291 = por %p289, %p290
      %p292 = scmp.ne.s32.totalorder %s278, %s279
      %p293 = scmp.eq.s32.totalorder %s24, 1
      %p294 = por %p292, %p293
      %p296 = scmp.ne.s32.totalorder %s279, %s295
      %p297 = scmp.eq.s32.totalorder %s24, 0
      %p298 = por %p296, %p297
      %s299 = ssub.s32 %s25, %s37
      %p300 = scmp.eq.s32.totalorder %s299, 0
      %s302 = sadd.s32 %s301, 1
      %s303 = scalar_select %p300, %s301, %s302
      %p306 = pneg %p300
      %p307 = scmp.eq.s32.totalorder %s18, 1
      %p308 = por %p306, %p307
      %p309 = scmp.ne.s32.totalorder %s301, %s304
      %p310 = scmp.eq.s32.totalorder %s18, 0
      %p311 = por %p309, %p310
      %p312 = scmp.ne.s32.totalorder %s301, %s304
      %p313 = scmp.eq.s32.totalorder %s23, 1
      %p314 = por %p312, %p313
      %p315 = scmp.ne.s32.totalorder %s304, %s305
      %p316 = scmp.eq.s32.totalorder %s23, 0
      %p317 = por %p315, %p316
      %p318 = scmp.ne.s32.totalorder %s304, %s305
      %p319 = scmp.eq.s32.totalorder %s24, 1
      %p320 = por %p318, %p319
      %p322 = scmp.ne.s32.totalorder %s305, %s321
      %p323 = scmp.eq.s32.totalorder %s24, 0
      %p324 = por %p322, %p323
      %p325 = scmp.le.s32.totalorder 1, %s18
      %p326 = scmp.lt.s32.totalorder %s18, 3
      %p327 = pnand %p325, %p326
      %p328 = pneg %p327
      // Predicated region
      $region9: #{tpu_custom_call.1} parent=5 // pred_check
        _
      $region10: #{tpu_custom_call.1} parent=5 // pred_check_branch
        %330 = sbr.rel (%p327) target = $region12
      $region11: #{tpu_custom_call.1} parent=5 // pred_region
        %s331 = ssub.s32 %s18, 1
        // Predicated region
        $region13: #{tpu_custom_call.1} parent=11 // pred_check
          %p332 = pneg %p56
        $region14: #{tpu_custom_call.1} parent=11 // pred_check_branch
          %334 = sbr.rel (%p332) target = $region16
        $region15: #{tpu_custom_call.1} parent=11 // pred_region
          %s335 = smul.u32 2, %s27
          %p336 = scmp.lt.s32.totalorder %s335, 1
          %s337 = scalar_select %p336, %s335, 1
          %s338 = smul.addr %s337, 2
          %s339 = smul.addr %s338, 4
          %s340 = scalar_lea.vmem %s0, %s339
          %s341 = smul.u32 2, %s27
        $region16: #{tpu_custom_call.1} parent=11 // pred_fallthru
          _
        // Predicated region
        $region17: #{tpu_custom_call.1} parent=11 // pred_check
          %p342 = pneg %p77
        $region18: #{tpu_custom_call.1} parent=11 // pred_check_branch
          %344 = sbr.rel (%p342) target = $region20
        $region19: #{tpu_custom_call.1} parent=11 // pred_region
          _
        $region20: #{tpu_custom_call.1} parent=11 // pred_fallthru
          _
        // Predicated region
        $region21: #{tpu_custom_call.1} parent=11 // pred_check
          %p345 = pneg %p98
        $region22: #{tpu_custom_call.1} parent=11 // pred_check_branch
          %347 = sbr.rel (%p345) target = $region24
        $region23: #{tpu_custom_call.1} parent=11 // pred_region
          _
        $region24: #{tpu_custom_call.1} parent=11 // pred_fallthru
          _
        // Predicated region
        $region25: #{tpu_custom_call.1} parent=11 // pred_check
          %p348 = pneg %p119
        $region26: #{tpu_custom_call.1} parent=11 // pred_check_branch
          %350 = sbr.rel (%p348) target = $region28
        $region27: #{tpu_custom_call.1} parent=11 // pred_region
          _
        $region28: #{tpu_custom_call.1} parent=11 // pred_fallthru
          _
        // Predicated region
        $region29: #{tpu_custom_call.1} parent=11 // pred_check
          %p351 = pneg %p140
        $region30: #{tpu_custom_call.1} parent=11 // pred_check_branch
          %353 = sbr.rel (%p351) target = $region32
        $region31: #{tpu_custom_call.1} parent=11 // pred_region
          _
        $region32: #{tpu_custom_call.1} parent=11 // pred_fallthru
          _
        // Predicated region
        $region33: #{tpu_custom_call.1} parent=11 // pred_check
          %p354 = pneg %p161
        $region34: #{tpu_custom_call.1} parent=11 // pred_check_branch
          %356 = sbr.rel (%p354) target = $region36
        $region35: #{tpu_custom_call.1} parent=11 // pred_region
          _
        $region36: #{tpu_custom_call.1} parent=11 // pred_fallthru
          _
      $region12: #{tpu_custom_call.1} parent=5 // pred_fallthru
        _
      %p357 = scmp.lt.s32.totalorder %s18, 2
      // Predicated region
      $region37: #{tpu_custom_call.1} parent=5 // pred_check
        %p358 = pneg %p357
      $region38: #{tpu_custom_call.1} parent=5 // pred_check_branch
        %360 = sbr.rel (%p358) target = $region40
      $region39: #{tpu_custom_call.1} parent=5 // pred_region
        // Predicated region
        $region41: #{tpu_custom_call.1} parent=39 // pred_check
          %p361 = pneg %p181
        $region42: #{tpu_custom_call.1} parent=39 // pred_check_branch
          %363 = sbr.rel (%p361) target = $region44
        $region43: #{tpu_custom_call.1} parent=39 // pred_region
          %p364 = scmp.lt.s32.totalorder %s26, 1
          %s365 = scalar_select %p364, %s26, 1
          %s366 = smul.addr %s365, 8
          %s367 = scalar_lea.vmem %s6, %s366
        $region44: #{tpu_custom_call.1} parent=39 // pred_fallthru
          _
        // Predicated region
        $region45: #{tpu_custom_call.1} parent=39 // pred_check
          %p368 = pneg %p207
        $region46: #{tpu_custom_call.1} parent=39 // pred_check_branch
          %370 = sbr.rel (%p368) target = $region48
        $region47: #{tpu_custom_call.1} parent=39 // pred_region
          %p371 = scmp.lt.s32.totalorder %s26, 1
          %s372 = scalar_select %p371, %s26, 1
          %s373 = smul.addr %s372, 4
          %s374 = smul.addr %s373, 4
          %s375 = scalar_lea.vmem %s7, %s374
        $region48: #{tpu_custom_call.1} parent=39 // pred_fallthru
          _
        // Predicated region
        $region49: #{tpu_custom_call.1} parent=39 // pred_check
          %p376 = pneg %p233
        $region50: #{tpu_custom_call.1} parent=39 // pred_check_branch
          %378 = sbr.rel (%p376) target = $region52
        $region51: #{tpu_custom_call.1} parent=39 // pred_region
          %p379 = scmp.lt.s32.totalorder %s26, 1
          %s380 = scalar_select %p379, %s26, 1
          %s381 = smul.addr %s380, 4
          %s382 = smul.addr %s381, 4
          %s383 = scalar_lea.vmem %s8, %s382
        $region52: #{tpu_custom_call.1} parent=39 // pred_fallthru
          _
        // Predicated region
        $region53: #{tpu_custom_call.1} parent=39 // pred_check
          %p384 = pneg %p259
        $region54: #{tpu_custom_call.1} parent=39 // pred_check_branch
          %386 = sbr.rel (%p384) target = $region56
        $region55: #{tpu_custom_call.1} parent=39 // pred_region
          %p387 = scmp.lt.s32.totalorder %s26, 1
          %s388 = scalar_select %p387, %s26, 1
          %s389 = smul.addr %s388, 4
          %s390 = smul.addr %s389, 4
          %s391 = scalar_lea.vmem %s9, %s390
        $region56: #{tpu_custom_call.1} parent=39 // pred_fallthru
          _
        // Predicated region
        $region57: #{tpu_custom_call.1} parent=39 // pred_check
          %p392 = pneg %p285
        $region58: #{tpu_custom_call.1} parent=39 // pred_check_branch
          %394 = sbr.rel (%p392) target = $region60
        $region59: #{tpu_custom_call.1} parent=39 // pred_region
          %p395 = scmp.lt.s32.totalorder %s26, 1
          %s396 = scalar_select %p395, %s26, 1
          %s397 = smul.addr %s396, 8
          %s398 = smul.addr %s397, 4
          %s399 = scalar_lea.vmem %s10, %s398
        $region60: #{tpu_custom_call.1} parent=39 // pred_fallthru
          _
      $region40: #{tpu_custom_call.1} parent=5 // pred_fallthru
        _
      %p400 = scmp.le.s32.totalorder 1, %s18
      %p401 = scmp.lt.s32.totalorder %s18, 3
      %p402 = pnand %p400, %p401
      %p403 = pneg %p402
      // Predicated region
      $region61: #{tpu_custom_call.1} parent=5 // pred_check
        _
      $region62: #{tpu_custom_call.1} parent=5 // pred_check_branch
        %405 = sbr.rel (%p402) target = $region64
      $region63: #{tpu_custom_call.1} parent=5 // pred_region
        %s406 = ssub.s32 %s18, 1
        %s407 = smul.u32 2, %s27
        %p408 = scmp.lt.s32.totalorder %s407, 1
        %s409 = scalar_select %p408, %s407, 1
        %s410 = smul.addr %s409, 2
        %s411 = smul.addr %s410, 4
        %s412 = scalar_lea.vmem %s0, %s411
        %p413 = pneg %p56
        %p414 = pneg %p53
        %p415 = pneg %p77
        %p416 = pneg %p74
        %p417 = pneg %p98
        %p418 = pneg %p95
        %p419 = pneg %p119
        %p420 = pneg %p116
        %p421 = pneg %p140
        %p422 = pneg %p137
        %p423 = pneg %p161
        %p424 = pneg %p158
        %p425 = scmp.lt.s32.totalorder %s28, 1
        %s426 = scalar_select %p425, %s28, 1
        %s427 = smul.addr %s426, 8
        %s428 = scalar_lea.vmem %s6, %s427
        %p429 = pneg %p187
        %p430 = pneg %p184
        %p431 = scmp.lt.s32.totalorder %s28, 1
        %s432 = scalar_select %p431, %s28, 1
        %s433 = smul.addr %s432, 4
        %s434 = smul.addr %s433, 4
        %s435 = scalar_lea.vmem %s7, %s434
        %p436 = pneg %p213
        %p437 = pneg %p210
        %p438 = scmp.lt.s32.totalorder %s28, 1
        %s439 = scalar_select %p438, %s28, 1
        %s440 = smul.addr %s439, 4
        %s441 = smul.addr %s440, 4
        %s442 = scalar_lea.vmem %s8, %s441
        %p443 = pneg %p239
        %p444 = pneg %p236
        %p445 = scmp.lt.s32.totalorder %s28, 1
        %s446 = scalar_select %p445, %s28, 1
        %s447 = smul.addr %s446, 4
        %s448 = smul.addr %s447, 4
        %s449 = scalar_lea.vmem %s9, %s448
        %p450 = pneg %p265
        %p451 = pneg %p262
        %p452 = scmp.lt.s32.totalorder %s28, 1
        %s453 = scalar_select %p452, %s28, 1
        %s454 = smul.addr %s453, 8
        %s455 = smul.addr %s454, 4
        %s456 = scalar_lea.vmem %s10, %s455
        %p457 = pneg %p291
        %p458 = pneg %p288
        %p459 = pneg %p317
        %p460 = pneg %p314
        %s461 = smul.u32 2, %s27
        %p462 = scmp.lt.s32.totalorder %s461, 1
        %s463 = scalar_select %p462, %s461, 1
        %s464 = smul.addr %s463, 2
        %s465 = smul.addr %s464, 4
        %s466 = scalar_lea.vmem %s0, %s465
        %s467 = smul.u32 2, %s27
        %p468 = scmp.lt.s32.totalorder %s28, 1
        %s469 = scalar_select %p468, %s28, 1
        %s470 = smul.addr %s469, 8
        %s471 = scalar_lea.vmem %s6, %s470
        %p472 = scmp.lt.s32.totalorder %s28, 1
        %s473 = scalar_select %p472, %s28, 1
        %s474 = smul.addr %s473, 4
        %s475 = smul.addr %s474, 4
        %s476 = scalar_lea.vmem %s7, %s475
        %p477 = scmp.lt.s32.totalorder %s28, 1
        %s478 = scalar_select %p477, %s28, 1
        %s479 = smul.addr %s478, 4
        %s480 = smul.addr %s479, 4
        %s481 = scalar_lea.vmem %s8, %s480
        %p482 = scmp.lt.s32.totalorder %s28, 1
        %s483 = scalar_select %p482, %s28, 1
        %s484 = smul.addr %s483, 4
        %s485 = smul.addr %s484, 4
        %s486 = scalar_lea.vmem %s9, %s485
        %p487 = scmp.lt.s32.totalorder %s28, 1
        %s488 = scalar_select %p487, %s28, 1
        %s489 = smul.addr %s488, 8
        %s490 = smul.addr %s489, 4
        %s491 = scalar_lea.vmem %s10, %s490
        %s492 = smul.u32 2, %s27
        %p494 = scmp.eq.s32.totalorder %s28, 0
        // Predicated region
        $region65: #{tpu_custom_call.1} parent=63 // pred_check
          %p495 = pneg %p494
        $region66: #{tpu_custom_call.1} parent=63 // pred_check_branch
          %497 = sbr.rel (%p495) target = $region68
        $region67: #{tpu_custom_call.1} parent=63 // pred_region
          %vm498 = vcmask 261120
          %499 = vst.msk [vmem:[#allocation2] sm:$0xff] %vm498, 0.0
          %500 = vst.msk [vmem:[#allocation2 + $0x8] sm:$0xff] %vm498, 0.0
          %v501 = vld [vmem:[%s2] sm:$0x1]
          %v502 = vld [vmem:[%s3] sm:$0x1]
          %v503 = vadd.f32 %v501, %v502
          %v504 = vld [vmem:[%s466] sm:$0xff]
          %v505 = vld [vmem:[%s1] sm:$0xff]
          %v506 = vld [vmem:[%s1 + $0x8] sm:$0xff]
          %v507 = vld [vmem:[%s1 + $0x10] sm:$0xff]
          %v508 = vld [vmem:[%s1 + $0x18] sm:$0xff]
          %v509 = vld [vmem:[%s1 + $0x20] sm:$0xff]
          %v510 = vld [vmem:[%s1 + $0x28] sm:$0xff]
          %v511 = vld [vmem:[%s1 + $0x30] sm:$0xff]
          %v512 = vld [vmem:[%s1 + $0x38] sm:$0xff]
          %v513 = vld [vmem:[%s1 + $0x40] sm:$0xff]
          %v514 = vld [vmem:[%s1 + $0x48] sm:$0xff]
          %v515 = vld [vmem:[%s1 + $0x50] sm:$0xff]
          %v516 = vld [vmem:[%s1 + $0x58] sm:$0xff]
          %v517 = vld [vmem:[%s1 + $0x60] sm:$0xff]
          %v518 = vld [vmem:[%s1 + $0x68] sm:$0xff]
          %v519 = vld [vmem:[%s1 + $0x70] sm:$0xff]
          %v520 = vld [vmem:[%s1 + $0x78] sm:$0xff]
          %v521 = vld [vmem:[%s1 + $0x80] sm:$0xff]
          %v522 = vld [vmem:[%s1 + $0x88] sm:$0xff]
          %v523 = vld [vmem:[%s1 + $0x90] sm:$0xff]
          %v524 = vld [vmem:[%s1 + $0x98] sm:$0xff]
          %v525 = vld [vmem:[%s1 + $0xa0] sm:$0xff]
          %v526 = vld [vmem:[%s1 + $0xa8] sm:$0xff]
          %v527 = vld [vmem:[%s1 + $0xb0] sm:$0xff]
          %v528 = vld [vmem:[%s1 + $0xb8] sm:$0xff]
          %vm529 = vcmask 253952
          %530 = vst.msk [vmem:[#allocation2] sm:$0x1] %vm529, %v503
          %v531 = vld [vmem:[%s3 + $0x1] sm:$0xf]
          %v533 = vcombine.high %v504, %v504
          %vm534 = vcmask 523264
          %v535 = vsel %vm534, %v533, 0
          %537 = vmatprep.subr.mxu0 0.0
          %538 = vmatpush1.msra.mxu0 %v505
          %539 = vmatprep.subr.mxu0 0.0
          %540 = vmatpush1.msra.mxu0 %v506
          %541 = vmatprep.subr.mxu0 0.0
          %542 = vmatpush1.msra.mxu0 %v507
          %543 = vmatprep.subr.mxu0 0.0
          %544 = vmatpush1.msra.mxu0 %v508
          %545 = vmatprep.subr.mxu0 0.0
          %546 = vmatpush1.msra.mxu0 %v509
          %547 = vmatprep.subr.mxu0 0.0
          %548 = vmatpush1.msra.mxu0 %v510
          %549 = vmatprep.subr.mxu0 0.0
          %550 = vmatpush1.msra.mxu0 %v511
          %551 = vmatprep.subr.mxu0 0.0
          %552 = vmatpush1.msra.mxu0 %v512
          %553 = vmatprep.subr.mxu0 0.0
          %554 = vmatpush1.msra.mxu0 %v513
          %555 = vmatprep.subr.mxu0 0.0
          %556 = vmatpush1.msra.mxu0 %v514
          %557 = vmatprep.subr.mxu0 0.0
          %558 = vmatpush1.msra.mxu0 %v515
          %559 = vmatprep.subr.mxu0 0.0
          %560 = vmatpush1.msra.mxu0 %v516
          %561 = vmatprep.subr.mxu0 0.0
          %562 = vmatpush1.msra.mxu0 %v517
          %563 = vmatprep.subr.mxu0 0.0
          %564 = vmatpush1.msra.mxu0 %v518
          %565 = vmatprep.subr.mxu0 0.0
          %566 = vmatpush1.msra.mxu0 %v519
          %567 = vmatprep.subr.mxu0 0.0
          %568 = vmatpush1.msra.mxu0 %v520
          %569 = vmatprep.subr.mxu0 0.0
          %570 = vmatpush1.msra.mxu0 %v521
          %571 = vmatprep.subr.mxu0 0.0
          %572 = vmatpush1.msra.mxu0 %v522
          %573 = vmatprep.subr.mxu0 0.0
          %574 = vmatpush1.msra.mxu0 %v523
          %575 = vmatprep.subr.mxu0 0.0
          %576 = vmatpush1.msra.mxu0 %v524
          %577 = vmatprep.subr.mxu0 0.0
          %578 = vmatpush1.msra.mxu0 %v525
          %579 = vmatprep.subr.mxu0 0.0
          %580 = vmatpush1.msra.mxu0 %v526
          %581 = vmatprep.subr.mxu0 0.0
          %582 = vmatpush1.msra.mxu0 %v527
          %583 = vmatprep.subr.mxu0 0.0
          %584 = vmatpush1.msra.mxu0 %v528
          %585 = vmatprep.subr.mxu0 0.0
          %586 = vmatpush1.msra.mxu0 0.0
          %587 = vmatprep.subr.mxu0 0.0
          %588 = vmatpush1.msra.mxu0 0.0
          %589 = vmatprep.subr.mxu0 0.0
          %590 = vmatpush1.msra.mxu0 0.0
          %591 = vmatprep.subr.mxu0 0.0
          %592 = vmatpush1.msra.mxu0 0.0
          %593 = vmatprep.subr.mxu0 0.0
          %594 = vmatpush1.msra.mxu0 0.0
          %595 = vmatprep.subr.mxu0 0.0
          %596 = vmatpush1.msra.mxu0 0.0
          %597 = vmatprep.subr.mxu0 0.0
          %598 = vmatpush1.msra.mxu0 0.0
          %599 = vmatprep.subr.mxu0 0.0
          %600 = vmatpush1.msra.mxu0 0.0
          %601 = vmatprep.mubr.f32.mxu0 %v535
          %602 = vmatmul.mubr.f32.gmra.mrb[0].mxu0 %v504
          %v603 = vpop.f32.mrb[0].mxu0
          %v604 = vadd.f32 %v531, %v603
          %v605 = vpop.f32.mrb[0].mxu0
          %606 = vdwg.mxu0
          %vm607 = vcmask 257024
          %608 = vst.msk [vmem:[#allocation2 + $0x1] sm:$0xf] %vm607, %v604
          %s609 = scalar_lea.vmem %s466, 8
          %v610 = vld [vmem:[%s609] sm:$0xff]
          %v611 = vld [vmem:[%s1] sm:$0xff]
          %v612 = vld [vmem:[%s1 + $0x8] sm:$0xff]
          %v613 = vld [vmem:[%s1 + $0x10] sm:$0xff]
          %v614 = vld [vmem:[%s1 + $0x18] sm:$0xff]
          %v615 = vld [vmem:[%s1 + $0x20] sm:$0xff]
          %v616 = vld [vmem:[%s1 + $0x28] sm:$0xff]
          %v617 = vld [vmem:[%s1 + $0x30] sm:$0xff]
          %v618 = vld [vmem:[%s1 + $0x38] sm:$0xff]
          %v619 = vld [vmem:[%s1 + $0x40] sm:$0xff]
          %v620 = vld [vmem:[%s1 + $0x48] sm:$0xff]
          %v621 = vld [vmem:[%s1 + $0x50] sm:$0xff]
          %v622 = vld [vmem:[%s1 + $0x58] sm:$0xff]
          %v623 = vld [vmem:[%s1 + $0x60] sm:$0xff]
          %v624 = vld [vmem:[%s1 + $0x68] sm:$0xff]
          %v625 = vld [vmem:[%s1 + $0x70] sm:$0xff]
          %v626 = vld [vmem:[%s1 + $0x78] sm:$0xff]
          %v627 = vld [vmem:[%s1 + $0x80] sm:$0xff]
          %v628 = vld [vmem:[%s1 + $0x88] sm:$0xff]
          %v629 = vld [vmem:[%s1 + $0x90] sm:$0xff]
          %v630 = vld [vmem:[%s1 + $0x98] sm:$0xff]
          %v631 = vld [vmem:[%s1 + $0xa0] sm:$0xff]
          %v632 = vld [vmem:[%s1 + $0xa8] sm:$0xff]
          %v633 = vld [vmem:[%s1 + $0xb0] sm:$0xff]
          %v634 = vld [vmem:[%s1 + $0xb8] sm:$0xff]
          %s635 = scalar_lea.vmem [#allocation2], 8
          %636 = vst.msk [vmem:[%s635] sm:$0x1] %vm529, %v503
          %v637 = vld [vmem:[%s3 + $0x1] sm:$0xf]
          %v639 = vcombine.high %v610, %v610
          %v640 = vsel %vm534, %v639, 0
          %642 = vmatprep.subr.mxu0 0.0
          %643 = vmatpush1.msra.mxu0 %v611
          %644 = vmatprep.subr.mxu0 0.0
          %645 = vmatpush1.msra.mxu0 %v612
          %646 = vmatprep.subr.mxu0 0.0
          %647 = vmatpush1.msra.mxu0 %v613
          %648 = vmatprep.subr.mxu0 0.0
          %649 = vmatpush1.msra.mxu0 %v614
          %650 = vmatprep.subr.mxu0 0.0
          %651 = vmatpush1.msra.mxu0 %v615
          %652 = vmatprep.subr.mxu0 0.0
          %653 = vmatpush1.msra.mxu0 %v616
          %654 = vmatprep.subr.mxu0 0.0
          %655 = vmatpush1.msra.mxu0 %v617
          %656 = vmatprep.subr.mxu0 0.0
          %657 = vmatpush1.msra.mxu0 %v618
          %658 = vmatprep.subr.mxu0 0.0
          %659 = vmatpush1.msra.mxu0 %v619
          %660 = vmatprep.subr.mxu0 0.0
          %661 = vmatpush1.msra.mxu0 %v620
          %662 = vmatprep.subr.mxu0 0.0
          %663 = vmatpush1.msra.mxu0 %v621
          %664 = vmatprep.subr.mxu0 0.0
          %665 = vmatpush1.msra.mxu0 %v622
          %666 = vmatprep.subr.mxu0 0.0
          %667 = vmatpush1.msra.mxu0 %v623
          %668 = vmatprep.subr.mxu0 0.0
          %669 = vmatpush1.msra.mxu0 %v624
          %670 = vmatprep.subr.mxu0 0.0
          %671 = vmatpush1.msra.mxu0 %v625
          %672 = vmatprep.subr.mxu0 0.0
          %673 = vmatpush1.msra.mxu0 %v626
          %674 = vmatprep.subr.mxu0 0.0
          %675 = vmatpush1.msra.mxu0 %v627
          %676 = vmatprep.subr.mxu0 0.0
          %677 = vmatpush1.msra.mxu0 %v628
          %678 = vmatprep.subr.mxu0 0.0
          %679 = vmatpush1.msra.mxu0 %v629
          %680 = vmatprep.subr.mxu0 0.0
          %681 = vmatpush1.msra.mxu0 %v630
          %682 = vmatprep.subr.mxu0 0.0
          %683 = vmatpush1.msra.mxu0 %v631
          %684 = vmatprep.subr.mxu0 0.0
          %685 = vmatpush1.msra.mxu0 %v632
          %686 = vmatprep.subr.mxu0 0.0
          %687 = vmatpush1.msra.mxu0 %v633
          %688 = vmatprep.subr.mxu0 0.0
          %689 = vmatpush1.msra.mxu0 %v634
          %690 = vmatprep.subr.mxu0 0.0
          %691 = vmatpush1.msra.mxu0 0.0
          %692 = vmatprep.subr.mxu0 0.0
          %693 = vmatpush1.msra.mxu0 0.0
          %694 = vmatprep.subr.mxu0 0.0
          %695 = vmatpush1.msra.mxu0 0.0
          %696 = vmatprep.subr.mxu0 0.0
          %697 = vmatpush1.msra.mxu0 0.0
          %698 = vmatprep.subr.mxu0 0.0
          %699 = vmatpush1.msra.mxu0 0.0
          %700 = vmatprep.subr.mxu0 0.0
          %701 = vmatpush1.msra.mxu0 0.0
          %702 = vmatprep.subr.mxu0 0.0
          %703 = vmatpush1.msra.mxu0 0.0
          %704 = vmatprep.subr.mxu0 0.0
          %705 = vmatpush1.msra.mxu0 0.0
          %706 = vmatprep.mubr.f32.mxu0 %v640
          %707 = vmatmul.mubr.f32.gmra.mrb[0].mxu0 %v610
          %v708 = vpop.f32.mrb[0].mxu0
          %v709 = vadd.f32 %v637, %v708
          %v710 = vpop.f32.mrb[0].mxu0
          %711 = vdwg.mxu0
          %712 = vst.msk [vmem:[%s635 + $0x1] sm:$0xf] %vm607, %v709
          %v713 = vld [vmem:[#allocation2] sm:$0xff]
          %v714 = vld [vmem:[#allocation2 + $0x8] sm:$0xff]
          %v715 = vld [vmem:[%s4] sm:$0x1]
          %v716 = vld [vmem:[%s5] sm:$0x1]
          %v717 = vsel %vm498, %v713, 0.0
          %718 = vadd.xlane.f32.xlu0 %v717
          %v719 = vpop.xlane.xlu0 %718
          %v720 = vsel %vm498, %v714, 0.0
          %721 = vadd.xlane.f32.xlu0 %v720
          %v722 = vpop.xlane.xlu0 %721
          %v723 = vrcp.pop 32.0
          %v724 = vmul.f32 %v719, %v723
          %v725 = vmul.f32 %v722, %v723
          %v726 = vsub.f32 %v713, %v724
          %v727 = vsub.f32 %v714, %v725
          %v728 = vmul.f32 %v726, %v726
          %v729 = vmul.f32 %v727, %v727
          %v730 = vsel %vm498, %v728, 0.0
          %731 = vadd.xlane.f32.xlu0 %v730
          %v732 = vpop.xlane.xlu0 %731
          %v733 = vsel %vm498, %v729, 0.0
          %734 = vadd.xlane.f32.xlu0 %v733
          %v735 = vpop.xlane.xlu0 %734
          %v736 = vmul.f32 %v732, %v723
          %v737 = vmul.f32 %v735, %v723
          %v738 = vadd.f32 %v736, 1e-05
          %v739 = vadd.f32 %v737, 1e-05
          %v740 = vrsqrt.pop %v738
          %v741 = vrsqrt.pop %v739
          %v742 = vmul.f32 %v726, %v740
          %v743 = vmul.f32 %v727, %v741
          %v745 = vlaneseq
          %v746 = vshrl.u32 %v745, 7
          %v747 = vsub.s32 0, %v746
          %v748 = vrot.slane %v715, %v747
          %v750 = vmul.f32 %v742, %v748
          %v751 = vmul.f32 %v743, %v748
          %v753 = vlaneseq
          %v754 = vshrl.u32 %v753, 7
          %v755 = vsub.s32 0, %v754
          %v756 = vrot.slane %v716, %v755
          %v758 = vadd.f32 %v750, %v756
          %v759 = vadd.f32 %v751, %v756
          %760 = vst.msk [vmem:[#allocation2] sm:$0xff] %vm498, %v758
          %761 = vst.msk [vmem:[#allocation2 + $0x8] sm:$0xff] %vm498, %v759
        $region68: #{tpu_custom_call.1} parent=63 // pred_fallthru
          _
        %v762 = vld [vmem:[#allocation2] sm:$0xff]
        %v763 = vld [vmem:[#allocation2 + $0x8] sm:$0xff]
        %v764 = vld [vmem:[%s471] sm:$0x1]
        %v765 = vld [vmem:[%s471 + $0x1] sm:$0x1]
        %v766 = vld [vmem:[%s471 + $0x2] sm:$0x1]
        %v767 = vld [vmem:[%s471 + $0x3] sm:$0x1]
        %v768 = vld [vmem:[%s471 + $0x4] sm:$0x1]
        %v769 = vld [vmem:[%s471 + $0x5] sm:$0x1]
        %v770 = vld [vmem:[%s471 + $0x6] sm:$0x1]
        %v771 = vld [vmem:[%s471 + $0x7] sm:$0x1]
        %vm772 = vcmask 261120
        %v773 = vsel %vm772, %v762, 0.0
        %774 = vadd.xlane.f32.xlu0 %v773
        %v775 = vpop.xlane.xlu0 %774
        %v776 = vsel %vm772, %v763, 0.0
        %777 = vadd.xlane.f32.xlu0 %v776
        %v778 = vpop.xlane.xlu0 %777
        %v779 = vrcp.pop 32.0
        %v780 = vmul.f32 %v775, %v779
        %v781 = vmul.f32 %v778, %v779
        %v782 = vsub.f32 %v762, %v780
        %v783 = vsub.f32 %v763, %v781
        %v784 = vmul.f32 %v782, %v782
        %v785 = vmul.f32 %v783, %v783
        %v786 = vsel %vm772, %v784, 0.0
        %787 = vadd.xlane.f32.xlu0 %v786
        %v788 = vpop.xlane.xlu0 %787
        %v789 = vsel %vm772, %v785, 0.0
        %790 = vadd.xlane.f32.xlu0 %v789
        %v791 = vpop.xlane.xlu0 %790
        %v792 = vmul.f32 %v788, %v779
        %v793 = vmul.f32 %v791, %v779
        %v794 = vadd.f32 %v792, 1e-05
        %v795 = vadd.f32 %v793, 1e-05
        %v796 = vrsqrt.pop %v794
        %v797 = vrsqrt.pop %v795
        %v798 = vmul.f32 %v782, %v796
        %v799 = vmul.f32 %v783, %v797
        %v800 = vlaneseq
        %v801 = vshrl.u32 %v800, 7
        %v802 = vsub.s32 0, %v801
        %v803 = vrot.slane %v764, %v802
        %v804 = vmul.f32 %v798, %v803
        %v805 = vmul.f32 %v799, %v803
        %v806 = vlaneseq
        %v807 = vshrl.u32 %v806, 7
        %v808 = vsub.s32 0, %v807
        %v809 = vrot.slane %v765, %v808
        %v810 = vadd.f32 %v804, %v809
        %v811 = vadd.f32 %v805, %v809
        %v812 = vpack.c.bf16 %v810, %v810
        %v813 = vpack.c.bf16 %v811, %v811
        %v814 = vld [vmem:[%s476] sm:$0xf]
        %v815 = vld [vmem:[%s476 + $0x4] sm:$0xf]
        %v816 = vld [vmem:[%s476 + $0x8] sm:$0xf]
        %v817 = vld [vmem:[%s476 + $0xc] sm:$0xf]
        %v818 = vlaneseq
        %v819 = vshrl.u32 %v818, 7
        %v820 = vsub.s32 0, %v819
        %v821 = vrot.slane %v770, %v820
        %v824 = vunpack.c.l.b16 %v812
        %v825 = vunpack.c.l.b16 %v813
        %v826 = vpack.c.b16 %v825, %v824
        %v831 = vunpack.c.l.b16 %v814
        %v832 = vunpack.c.l.b16 %v815
        %v833 = vunpack.c.l.b16 %v816
        %v834 = vunpack.c.l.b16 %v817
        %v835 = vpack.c.b16 %v832, %v831
        %v836 = vpack.c.b16 %v834, %v833
        %v840 = vsel %vm772, %v826, 0
        %842 = vmatprep.subr.bf16.mxu0 0
        %843 = vmatpush1.bf16.msra.mxu0 %v835
        %844 = vmatprep.subr.bf16.mxu0 0
        %845 = vmatpush1.bf16.msra.mxu0 %v836
        %846 = vmatprep.subr.bf16.mxu0 0
        %847 = vmatpush1.bf16.msra.mxu0 0
        %848 = vmatprep.subr.bf16.mxu0 0
        %849 = vmatpush1.bf16.msra.mxu0 0
        %850 = vmatprep.subr.bf16.mxu0 0
        %851 = vmatpush1.bf16.msra.mxu0 0
        %852 = vmatprep.subr.bf16.mxu0 0
        %853 = vmatpush1.bf16.msra.mxu0 0
        %854 = vmatprep.subr.bf16.mxu0 0
        %855 = vmatpush1.bf16.msra.mxu0 0
        %856 = vmatprep.subr.bf16.mxu0 0
        %857 = vmatpush1.bf16.msra.mxu0 0
        %858 = vmatprep.subr.bf16.mxu0 0
        %859 = vmatpush1.bf16.msra.mxu0 0
        %860 = vmatprep.subr.bf16.mxu0 0
        %861 = vmatpush1.bf16.msra.mxu0 0
        %862 = vmatprep.subr.bf16.mxu0 0
        %863 = vmatpush1.bf16.msra.mxu0 0
        %864 = vmatprep.subr.bf16.mxu0 0
        %865 = vmatpush1.bf16.msra.mxu0 0
        %866 = vmatprep.subr.bf16.mxu0 0
        %867 = vmatpush1.bf16.msra.mxu0 0
        %868 = vmatprep.subr.bf16.mxu0 0
        %869 = vmatpush1.bf16.msra.mxu0 0
        %870 = vmatprep.subr.bf16.mxu0 0
        %871 = vmatpush1.bf16.msra.mxu0 0
        %872 = vmatprep.subr.bf16.mxu0 0
        %873 = vmatpush1.bf16.msra.mxu0 0
        %874 = vmatprep.mubr.bf16.mxu0 0
        %875 = vmatmul.mubr.bf16.gmra.mrb[0].mxu0 %v840
        %v876 = vpop.f32.mrb[0].mxu0
        %v877 = vadd.f32 %v821, %v876
        %v878 = vpop.f32.mrb[0].mxu0
        %v879 = vpop.f32.mrb[0].mxu0
        %v880 = vadd.f32 %v821, %v879
        %v881 = vpop.f32.mrb[0].mxu0
        %882 = vdwg.mxu0
        %885 = vrot.lane.b32.xlu0 %v877, 120
        %v886 = vpop.permute.xlu0 %885
        %887 = vrot.lane.b32.xlu0 %v880, 120
        %v888 = vpop.permute.xlu0 %887
        %891 = vrot.lane.b32.xlu0 %v877, 112
        %v892 = vpop.permute.xlu0 %891
        %893 = vrot.lane.b32.xlu0 %v880, 112
        %v894 = vpop.permute.xlu0 %893
        %897 = vrot.lane.b32.xlu0 %v877, 104
        %v898 = vpop.permute.xlu0 %897
        %899 = vrot.lane.b32.xlu0 %v880, 104
        %v900 = vpop.permute.xlu0 %899
        %v903 = vmul.f32 %v877, 0.35355338
        %v904 = vmul.f32 %v880, 0.35355338
        %v905 = vmul.f32 %v886, 0.35355338
        %v906 = vmul.f32 %v888, 0.35355338
        %v907 = vmul.f32 %v892, 0.35355338
        %v908 = vmul.f32 %v894, 0.35355338
        %v909 = vmul.f32 %v898, 0.35355338
        %v910 = vmul.f32 %v900, 0.35355338
        %v911 = vpack.c.bf16 %v903, %v903
        %v912 = vpack.c.bf16 %v904, %v904
        %v913 = vpack.c.bf16 %v905, %v905
        %v914 = vpack.c.bf16 %v906, %v906
        %v915 = vpack.c.bf16 %v907, %v907
        %v916 = vpack.c.bf16 %v908, %v908
        %v917 = vpack.c.bf16 %v909, %v909
        %v918 = vpack.c.bf16 %v910, %v910
        %v919 = vpack.c.bf16 %v877, %v877
        %v920 = vpack.c.bf16 %v880, %v880
        %v921 = vpack.c.bf16 %v886, %v886
        %v922 = vpack.c.bf16 %v888, %v888
        %v923 = vpack.c.bf16 %v892, %v892
        %v924 = vpack.c.bf16 %v894, %v894
        %v925 = vpack.c.bf16 %v898, %v898
        %v926 = vpack.c.bf16 %v900, %v900
        %928 = vrot.lane.b32.xlu0 %v919, 96
        %v929 = vpop.permute.xlu0 %928
        %vm930 = vcmask 64512
        %v932 = vsel %vm930, %v911, 0
        %v935 = vsel %vm930, %v929, 0
        %937 = vmatprep.subr.bf16.mxu0 0
        %938 = vmatpush1.bf16.xpose.msra.mxu0 %v935
        %939 = vmatprep.subr.bf16.mxu0 0
        %940 = vmatpush1.bf16.xpose.msra.mxu0 0
        %941 = vmatprep.subr.bf16.mxu0 0
        %942 = vmatpush1.bf16.xpose.msra.mxu0 0
        %943 = vmatprep.subr.bf16.mxu0 0
        %944 = vmatpush1.bf16.xpose.msra.mxu0 0
        %945 = vmatprep.subr.bf16.mxu0 0
        %946 = vmatpush1.bf16.xpose.msra.mxu0 0
        %947 = vmatprep.subr.bf16.mxu0 0
        %948 = vmatpush1.bf16.xpose.msra.mxu0 0
        %949 = vmatprep.subr.bf16.mxu0 0
        %950 = vmatpush1.bf16.xpose.msra.mxu0 0
        %951 = vmatprep.subr.bf16.mxu0 0
        %952 = vmatpush1.bf16.xpose.msra.mxu0 0
        %953 = vmatprep.subr.bf16.mxu0 0
        %954 = vmatpush1.bf16.xpose.msra.mxu0 0
        %955 = vmatprep.subr.bf16.mxu0 0
        %956 = vmatpush1.bf16.xpose.msra.mxu0 0
        %957 = vmatprep.subr.bf16.mxu0 0
        %958 = vmatpush1.bf16.xpose.msra.mxu0 0
        %959 = vmatprep.subr.bf16.mxu0 0
        %960 = vmatpush1.bf16.xpose.msra.mxu0 0
        %961 = vmatprep.subr.bf16.mxu0 0
        %962 = vmatpush1.bf16.xpose.msra.mxu0 0
        %963 = vmatprep.subr.bf16.mxu0 0
        %964 = vmatpush1.bf16.xpose.msra.mxu0 0
        %965 = vmatprep.subr.bf16.mxu0 0
        %966 = vmatpush1.bf16.xpose.msra.mxu0 0
        %967 = vmatprep.subr.bf16.mxu0 0
        %968 = vmatpush1.bf16.xpose.msra.mxu0 0
        %969 = vmatprep.mubr.bf16.mxu0 0
        %970 = vmatmul.mubr.bf16.gmra.mrb[0].mxu0 %v932
        %v971 = vpop.f32.mrb[0].mxu0
        %v972 = vadd.f32 0.0, %v971
        %v973 = vpop.f32.mrb[0].mxu0
        %v974 = vpop.f32.mrb[0].mxu0
        %v975 = vpop.f32.mrb[0].mxu0
        %976 = vdwg.mxu0
        %978 = vrot.lane.b32.xlu0 %v920, 96
        %v979 = vpop.permute.xlu0 %978
        %v981 = vsel %vm930, %v912, 0
        %v984 = vsel %vm930, %v979, 0
        %986 = vmatprep.subr.bf16.mxu0 0
        %987 = vmatpush1.bf16.xpose.msra.mxu0 %v984
        %988 = vmatprep.subr.bf16.mxu0 0
        %989 = vmatpush1.bf16.xpose.msra.mxu0 0
        %990 = vmatprep.subr.bf16.mxu0 0
        %991 = vmatpush1.bf16.xpose.msra.mxu0 0
        %992 = vmatprep.subr.bf16.mxu0 0
        %993 = vmatpush1.bf16.xpose.msra.mxu0 0
        %994 = vmatprep.subr.bf16.mxu0 0
        %995 = vmatpush1.bf16.xpose.msra.mxu0 0
        %996 = vmatprep.subr.bf16.mxu0 0
        %997 = vmatpush1.bf16.xpose.msra.mxu0 0
        %998 = vmatprep.subr.bf16.mxu0 0
        %999 = vmatpush1.bf16.xpose.msra.mxu0 0
        %1000 = vmatprep.subr.bf16.mxu0 0
        %1001 = vmatpush1.bf16.xpose.msra.mxu0 0
        %1002 = vmatprep.subr.bf16.mxu0 0
        %1003 = vmatpush1.bf16.xpose.msra.mxu0 0
        %1004 = vmatprep.subr.bf16.mxu0 0
        %1005 = vmatpush1.bf16.xpose.msra.mxu0 0
        %1006 = vmatprep.subr.bf16.mxu0 0
        %1007 = vmatpush1.bf16.xpose.msra.mxu0 0
        %1008 = vmatprep.subr.bf16.mxu0 0
        %1009 = vmatpush1.bf16.xpose.msra.mxu0 0
        %1010 = vmatprep.subr.bf16.mxu0 0
        %1011 = vmatpush1.bf16.xpose.msra.mxu0 0
        %1012 = vmatprep.subr.bf16.mxu0 0
        %1013 = vmatpush1.bf16.xpose.msra.mxu0 0
        %1014 = vmatprep.subr.bf16.mxu0 0
        %1015 = vmatpush1.bf16.xpose.msra.mxu0 0
        %1016 = vmatprep.subr.bf16.mxu0 0
        %1017 = vmatpush1.bf16.xpose.msra.mxu0 0
        %1018 = vmatprep.mubr.bf16.mxu0 0
        %1019 = vmatmul.mubr.bf16.gmra.mrb[0].mxu0 %v981
        %v1020 = vpop.f32.mrb[0].mxu0
        %v1021 = vadd.f32 0.0, %v1020
        %v1022 = vpop.f32.mrb[0].mxu0
        %v1023 = vpop.f32.mrb[0].mxu0
        %v1024 = vpop.f32.mrb[0].mxu0
        %1025 = vdwg.mxu0
        %1027 = vrot.lane.b32.xlu0 %v921, 96
        %v1028 = vpop.permute.xlu0 %1027
        %v1030 = vsel %vm930, %v913, 0
        %v1033 = vsel %vm930, %v1028, 0
        %1035 = vmatprep.subr.bf16.mxu0 0
        %1036 = vmatpush1.bf16.xpose.msra.mxu0 %v1033
        %1037 = vmatprep.subr.bf16.mxu0 0
        %1038 = vmatpush1.bf16.xpose.msra.mxu0 0
        %1039 = vmatprep.subr.bf16.mxu0 0
        %1040 = vmatpush1.bf16.xpose.msra.mxu0 0
        %1041 = vmatprep.subr.bf16.mxu0 0
        %1042 = vmatpush1.bf16.xpose.msra.mxu0 0
        %1043 = vmatprep.subr.bf16.mxu0 0
        %1044 = vmatpush1.bf16.xpose.msra.mxu0 0
        %1045 = vmatprep.subr.bf16.mxu0 0
        %1046 = vmatpush1.bf16.xpose.msra.mxu0 0
        %1047 = vmatprep.subr.bf16.mxu0 0
        %1048 = vmatpush1.bf16.xpose.msra.mxu0 0
        %1049 = vmatprep.subr.bf16.mxu0 0
        %1050 = vmatpush1.bf16.xpose.msra.mxu0 0
        %1051 = vmatprep.subr.bf16.mxu0 0
        %1052 = vmatpush1.bf16.xpose.msra.mxu0 0
        %1053 = vmatprep.subr.bf16.mxu0 0
        %1054 = vmatpush1.bf16.xpose.msra.mxu0 0
        %1055 = vmatprep.subr.bf16.mxu0 0
        %1056 = vmatpush1.bf16.xpose.msra.mxu0 0
        %1057 = vmatprep.subr.bf16.mxu0 0
        %1058 = vmatpush1.bf16.xpose.msra.mxu0 0
        %1059 = vmatprep.subr.bf16.mxu0 0
        %1060 = vmatpush1.bf16.xpose.msra.mxu0 0
        %1061 = vmatprep.subr.bf16.mxu0 0
        %1062 = vmatpush1.bf16.xpose.msra.mxu0 0
        %1063 = vmatprep.subr.bf16.mxu0 0
        %1064 = vmatpush1.bf16.xpose.msra.mxu0 0
        %1065 = vmatprep.subr.bf16.mxu0 0
        %1066 = vmatpush1.bf16.xpose.msra.mxu0 0
        %1067 = vmatprep.mubr.bf16.mxu0 0
        %1068 = vmatmul.mubr.bf16.gmra.mrb[0].mxu0 %v1030
        %v1069 = vpop.f32.mrb[0].mxu0
        %v1070 = vadd.f32 0.0, %v1069
        %v1071 = vpop.f32.mrb[0].mxu0
        %v1072 = vpop.f32.mrb[0].mxu0
        %v1073 = vpop.f32.mrb[0].mxu0
        %1074 = vdwg.mxu0
        %1076 = vrot.lane.b32.xlu0 %v922, 96
        %v1077 = vpop.permute.xlu0 %1076
        %v1079 = vsel %vm930, %v914, 0
        %v1082 = vsel %vm930, %v1077, 0
        %1084 = vmatprep.subr.bf16.mxu0 0
        %1085 = vmatpush1.bf16.xpose.msra.mxu0 %v1082
        %1086 = vmatprep.subr.bf16.mxu0 0
        %1087 = vmatpush1.bf16.xpose.msra.mxu0 0
        %1088 = vmatprep.subr.bf16.mxu0 0
        %1089 = vmatpush1.bf16.xpose.msra.mxu0 0
        %1090 = vmatprep.subr.bf16.mxu0 0
        %1091 = vmatpush1.bf16.xpose.msra.mxu0 0
        %1092 = vmatprep.subr.bf16.mxu0 0
        %1093 = vmatpush1.bf16.xpose.msra.mxu0 0
        %1094 = vmatprep.subr.bf16.mxu0 0
        %1095 = vmatpush1.bf16.xpose.msra.mxu0 0
        %1096 = vmatprep.subr.bf16.mxu0 0
        %1097 = vmatpush1.bf16.xpose.msra.mxu0 0
        %1098 = vmatprep.subr.bf16.mxu0 0
        %1099 = vmatpush1.bf16.xpose.msra.mxu0 0
        %1100 = vmatprep.subr.bf16.mxu0 0
        %1101 = vmatpush1.bf16.xpose.msra.mxu0 0
        %1102 = vmatprep.subr.bf16.mxu0 0
        %1103 = vmatpush1.bf16.xpose.msra.mxu0 0
        %1104 = vmatprep.subr.bf16.mxu0 0
        %1105 = vmatpush1.bf16.xpose.msra.mxu0 0
        %1106 = vmatprep.subr.bf16.mxu0 0
        %1107 = vmatpush1.bf16.xpose.msra.mxu0 0
        %1108 = vmatprep.subr.bf16.mxu0 0
        %1109 = vmatpush1.bf16.xpose.msra.mxu0 0
        %1110 = vmatprep.subr.bf16.mxu0 0
        %1111 = vmatpush1.bf16.xpose.msra.mxu0 0
        %1112 = vmatprep.subr.bf16.mxu0 0
        %1113 = vmatpush1.bf16.xpose.msra.mxu0 0
        %1114 = vmatprep.subr.bf16.mxu0 0
        %1115 = vmatpush1.bf16.xpose.msra.mxu0 0
        %1116 = vmatprep.mubr.bf16.mxu0 0
        %1117 = vmatmul.mubr.bf16.gmra.mrb[0].mxu0 %v1079
        %v1118 = vpop.f32.mrb[0].mxu0
        %v1119 = vadd.f32 0.0, %v1118
        %v1120 = vpop.f32.mrb[0].mxu0
        %v1121 = vpop.f32.mrb[0].mxu0
        %v1122 = vpop.f32.mrb[0].mxu0
        %1123 = vdwg.mxu0
        %1125 = vrot.lane.b32.xlu0 %v923, 96
        %v1126 = vpop.permute.xlu0 %1125
        %v1128 = vsel %vm930, %v915, 0
        %v1131 = vsel %vm930, %v1126, 0
        %1133 = vmatprep.subr.bf16.mxu0 0
        %1134 = vmatpush1.bf16.xpose.msra.mxu0 %v1131
        %1135 = vmatprep.subr.bf16.mxu0 0
        %1136 = vmatpush1.bf16.xpose.msra.mxu0 0
        %1137 = vmatprep.subr.bf16.mxu0 0
        %1138 = vmatpush1.bf16.xpose.msra.mxu0 0
        %1139 = vmatprep.subr.bf16.mxu0 0
        %1140 = vmatpush1.bf16.xpose.msra.mxu0 0
        %1141 = vmatprep.subr.bf16.mxu0 0
        %1142 = vmatpush1.bf16.xpose.msra.mxu0 0
        %1143 = vmatprep.subr.bf16.mxu0 0
        %1144 = vmatpush1.bf16.xpose.msra.mxu0 0
        %1145 = vmatprep.subr.bf16.mxu0 0
        %1146 = vmatpush1.bf16.xpose.msra.mxu0 0
        %1147 = vmatprep.subr.bf16.mxu0 0
        %1148 = vmatpush1.bf16.xpose.msra.mxu0 0
        %1149 = vmatprep.subr.bf16.mxu0 0
        %1150 = vmatpush1.bf16.xpose.msra.mxu0 0
        %1151 = vmatprep.subr.bf16.mxu0 0
        %1152 = vmatpush1.bf16.xpose.msra.mxu0 0
        %1153 = vmatprep.subr.bf16.mxu0 0
        %1154 = vmatpush1.bf16.xpose.msra.mxu0 0
        %1155 = vmatprep.subr.bf16.mxu0 0
        %1156 = vmatpush1.bf16.xpose.msra.mxu0 0
        %1157 = vmatprep.subr.bf16.mxu0 0
        %1158 = vmatpush1.bf16.xpose.msra.mxu0 0
        %1159 = vmatprep.subr.bf16.mxu0 0
        %1160 = vmatpush1.bf16.xpose.msra.mxu0 0
        %1161 = vmatprep.subr.bf16.mxu0 0
        %1162 = vmatpush1.bf16.xpose.msra.mxu0 0
        %1163 = vmatprep.subr.bf16.mxu0 0
        %1164 = vmatpush1.bf16.xpose.msra.mxu0 0
        %1165 = vmatprep.mubr.bf16.mxu0 0
        %1166 = vmatmul.mubr.bf16.gmra.mrb[0].mxu0 %v1128
        %v1167 = vpop.f32.mrb[0].mxu0
        %v1168 = vadd.f32 0.0, %v1167
        %v1169 = vpop.f32.mrb[0].mxu0
        %v1170 = vpop.f32.mrb[0].mxu0
        %v1171 = vpop.f32.mrb[0].mxu0
        %1172 = vdwg.mxu0
        %1174 = vrot.lane.b32.xlu0 %v924, 96
        %v1175 = vpop.permute.xlu0 %1174
        %v1177 = vsel %vm930, %v916, 0
        %v1180 = vsel %vm930, %v1175, 0
        %1182 = vmatprep.subr.bf16.mxu0 0
        %1183 = vmatpush1.bf16.xpose.msra.mxu0 %v1180
        %1184 = vmatprep.subr.bf16.mxu0 0
        %1185 = vmatpush1.bf16.xpose.msra.mxu0 0
        %1186 = vmatprep.subr.bf16.mxu0 0
        %1187 = vmatpush1.bf16.xpose.msra.mxu0 0
        %1188 = vmatprep.subr.bf16.mxu0 0
        %1189 = vmatpush1.bf16.xpose.msra.mxu0 0
        %1190 = vmatprep.subr.bf16.mxu0 0
        %1191 = vmatpush1.bf16.xpose.msra.mxu0 0
        %1192 = vmatprep.subr.bf16.mxu0 0
        %1193 = vmatpush1.bf16.xpose.msra.mxu0 0
        %1194 = vmatprep.subr.bf16.mxu0 0
        %1195 = vmatpush1.bf16.xpose.msra.mxu0 0
        %1196 = vmatprep.subr.bf16.mxu0 0
        %1197 = vmatpush1.bf16.xpose.msra.mxu0 0
        %1198 = vmatprep.subr.bf16.mxu0 0
        %1199 = vmatpush1.bf16.xpose.msra.mxu0 0
        %1200 = vmatprep.subr.bf16.mxu0 0
        %1201 = vmatpush1.bf16.xpose.msra.mxu0 0
        %1202 = vmatprep.subr.bf16.mxu0 0
        %1203 = vmatpush1.bf16.xpose.msra.mxu0 0
        %1204 = vmatprep.subr.bf16.mxu0 0
        %1205 = vmatpush1.bf16.xpose.msra.mxu0 0
        %1206 = vmatprep.subr.bf16.mxu0 0
        %1207 = vmatpush1.bf16.xpose.msra.mxu0 0
        %1208 = vmatprep.subr.bf16.mxu0 0
        %1209 = vmatpush1.bf16.xpose.msra.mxu0 0
        %1210 = vmatprep.subr.bf16.mxu0 0
        %1211 = vmatpush1.bf16.xpose.msra.mxu0 0
        %1212 = vmatprep.subr.bf16.mxu0 0
        %1213 = vmatpush1.bf16.xpose.msra.mxu0 0
        %1214 = vmatprep.mubr.bf16.mxu0 0
        %1215 = vmatmul.mubr.bf16.gmra.mrb[0].mxu0 %v1177
        %v1216 = vpop.f32.mrb[0].mxu0
        %v1217 = vadd.f32 0.0, %v1216
        %v1218 = vpop.f32.mrb[0].mxu0
        %v1219 = vpop.f32.mrb[0].mxu0
        %v1220 = vpop.f32.mrb[0].mxu0
        %1221 = vdwg.mxu0
        %1223 = vrot.lane.b32.xlu0 %v925, 96
        %v1224 = vpop.permute.xlu0 %1223
        %v1226 = vsel %vm930, %v917, 0
        %v1229 = vsel %vm930, %v1224, 0
        %1231 = vmatprep.subr.bf16.mxu0 0
        %1232 = vmatpush1.bf16.xpose.msra.mxu0 %v1229
        %1233 = vmatprep.subr.bf16.mxu0 0
        %1234 = vmatpush1.bf16.xpose.msra.mxu0 0
        %1235 = vmatprep.subr.bf16.mxu0 0
        %1236 = vmatpush1.bf16.xpose.msra.mxu0 0
        %1237 = vmatprep.subr.bf16.mxu0 0
        %1238 = vmatpush1.bf16.xpose.msra.mxu0 0
        %1239 = vmatprep.subr.bf16.mxu0 0
        %1240 = vmatpush1.bf16.xpose.msra.mxu0 0
        %1241 = vmatprep.subr.bf16.mxu0 0
        %1242 = vmatpush1.bf16.xpose.msra.mxu0 0
        %1243 = vmatprep.subr.bf16.mxu0 0
        %1244 = vmatpush1.bf16.xpose.msra.mxu0 0
        %1245 = vmatprep.subr.bf16.mxu0 0
        %1246 = vmatpush1.bf16.xpose.msra.mxu0 0
        %1247 = vmatprep.subr.bf16.mxu0 0
        %1248 = vmatpush1.bf16.xpose.msra.mxu0 0
        %1249 = vmatprep.subr.bf16.mxu0 0
        %1250 = vmatpush1.bf16.xpose.msra.mxu0 0
        %1251 = vmatprep.subr.bf16.mxu0 0
        %1252 = vmatpush1.bf16.xpose.msra.mxu0 0
        %1253 = vmatprep.subr.bf16.mxu0 0
        %1254 = vmatpush1.bf16.xpose.msra.mxu0 0
        %1255 = vmatprep.subr.bf16.mxu0 0
        %1256 = vmatpush1.bf16.xpose.msra.mxu0 0
        %1257 = vmatprep.subr.bf16.mxu0 0
        %1258 = vmatpush1.bf16.xpose.msra.mxu0 0
        %1259 = vmatprep.subr.bf16.mxu0 0
        %1260 = vmatpush1.bf16.xpose.msra.mxu0 0
        %1261 = vmatprep.subr.bf16.mxu0 0
        %1262 = vmatpush1.bf16.xpose.msra.mxu0 0
        %1263 = vmatprep.mubr.bf16.mxu0 0
        %1264 = vmatmul.mubr.bf16.gmra.mrb[0].mxu0 %v1226
        %v1265 = vpop.f32.mrb[0].mxu0
        %v1266 = vadd.f32 0.0, %v1265
        %v1267 = vpop.f32.mrb[0].mxu0
        %v1268 = vpop.f32.mrb[0].mxu0
        %v1269 = vpop.f32.mrb[0].mxu0
        %1270 = vdwg.mxu0
        %1272 = vrot.lane.b32.xlu0 %v926, 96
        %v1273 = vpop.permute.xlu0 %1272
        %v1275 = vsel %vm930, %v918, 0
        %v1278 = vsel %vm930, %v1273, 0
        %1280 = vmatprep.subr.bf16.mxu0 0
        %1281 = vmatpush1.bf16.xpose.msra.mxu0 %v1278
        %1282 = vmatprep.subr.bf16.mxu0 0
        %1283 = vmatpush1.bf16.xpose.msra.mxu0 0
        %1284 = vmatprep.subr.bf16.mxu0 0
        %1285 = vmatpush1.bf16.xpose.msra.mxu0 0
        %1286 = vmatprep.subr.bf16.mxu0 0
        %1287 = vmatpush1.bf16.xpose.msra.mxu0 0
        %1288 = vmatprep.subr.bf16.mxu0 0
        %1289 = vmatpush1.bf16.xpose.msra.mxu0 0
        %1290 = vmatprep.subr.bf16.mxu0 0
        %1291 = vmatpush1.bf16.xpose.msra.mxu0 0
        %1292 = vmatprep.subr.bf16.mxu0 0
        %1293 = vmatpush1.bf16.xpose.msra.mxu0 0
        %1294 = vmatprep.subr.bf16.mxu0 0
        %1295 = vmatpush1.bf16.xpose.msra.mxu0 0
        %1296 = vmatprep.subr.bf16.mxu0 0
        %1297 = vmatpush1.bf16.xpose.msra.mxu0 0
        %1298 = vmatprep.subr.bf16.mxu0 0
        %1299 = vmatpush1.bf16.xpose.msra.mxu0 0
        %1300 = vmatprep.subr.bf16.mxu0 0
        %1301 = vmatpush1.bf16.xpose.msra.mxu0 0
        %1302 = vmatprep.subr.bf16.mxu0 0
        %1303 = vmatpush1.bf16.xpose.msra.mxu0 0
        %1304 = vmatprep.subr.bf16.mxu0 0
        %1305 = vmatpush1.bf16.xpose.msra.mxu0 0
        %1306 = vmatprep.subr.bf16.mxu0 0
        %1307 = vmatpush1.bf16.xpose.msra.mxu0 0
        %1308 = vmatprep.subr.bf16.mxu0 0
        %1309 = vmatpush1.bf16.xpose.msra.mxu0 0
        %1310 = vmatprep.subr.bf16.mxu0 0
        %1311 = vmatpush1.bf16.xpose.msra.mxu0 0
        %1312 = vmatprep.mubr.bf16.mxu0 0
        %1313 = vmatmul.mubr.bf16.gmra.mrb[0].mxu0 %v1275
        %v1314 = vpop.f32.mrb[0].mxu0
        %v1315 = vadd.f32 0.0, %v1314
        %v1316 = vpop.f32.mrb[0].mxu0
        %v1317 = vpop.f32.mrb[0].mxu0
        %v1318 = vpop.f32.mrb[0].mxu0
        %1319 = vdwg.mxu0
        %v1320 = vlaneseq
        %v1321 = vand.u32 %v1320, 127
        %vm1322 = vcmp.lt.s32.totalorder %v1321, 5
        %v1323 = vsel %vm1322, 1, 0
        %vm1324 = vcmp.eq.s32.totalorder %v1323, 1
        %v1325 = vsel %vm1324, %v972, -1e+30
        %v1326 = vsel %vm1324, %v1021, -1e+30
        %v1327 = vsel %vm1324, %v1070, -1e+30
        %v1328 = vsel %vm1324, %v1119, -1e+30
        %v1329 = vsel %vm1324, %v1168, -1e+30
        %v1330 = vsel %vm1324, %v1217, -1e+30
        %v1331 = vsel %vm1324, %v1266, -1e+30
        %v1332 = vsel %vm1324, %v1315, -1e+30
        %v1333 = vsel %vm930, %v1325, -inf
        %1334 = vmax.xlane.f32.xlu0 %v1333
        %v1335 = vpop.xlane.xlu0 %1334
        %v1336 = vsel %vm930, %v1326, -inf
        %1337 = vmax.xlane.f32.xlu0 %v1336
        %v1338 = vpop.xlane.xlu0 %1337
        %v1339 = vsel %vm930, %v1327, -inf
        %1340 = vmax.xlane.f32.xlu0 %v1339
        %v1341 = vpop.xlane.xlu0 %1340
        %v1342 = vsel %vm930, %v1328, -inf
        %1343 = vmax.xlane.f32.xlu0 %v1342
        %v1344 = vpop.xlane.xlu0 %1343
        %v1345 = vsel %vm930, %v1329, -inf
        %1346 = vmax.xlane.f32.xlu0 %v1345
        %v1347 = vpop.xlane.xlu0 %1346
        %v1348 = vsel %vm930, %v1330, -inf
        %1349 = vmax.xlane.f32.xlu0 %v1348
        %v1350 = vpop.xlane.xlu0 %1349
        %v1351 = vsel %vm930, %v1331, -inf
        %1352 = vmax.xlane.f32.xlu0 %v1351
        %v1353 = vpop.xlane.xlu0 %1352
        %v1354 = vsel %vm930, %v1332, -inf
        %1355 = vmax.xlane.f32.xlu0 %v1354
        %v1356 = vpop.xlane.xlu0 %1355
        %v1357 = vsub.f32 %v1325, %v1335
        %v1358 = vsub.f32 %v1326, %v1338
        %v1359 = vsub.f32 %v1327, %v1341
        %v1360 = vsub.f32 %v1328, %v1344
        %v1361 = vsub.f32 %v1329, %v1347
        %v1362 = vsub.f32 %v1330, %v1350
        %v1363 = vsub.f32 %v1331, %v1353
        %v1364 = vsub.f32 %v1332, %v1356
        %v1365 = vmul.f32 %v1357, 1.442695
        %v1366 = vpow.pop %v1365
        %v1367 = vmul.f32 %v1358, 1.442695
        %v1368 = vpow.pop %v1367
        %v1369 = vmul.f32 %v1359, 1.442695
        %v1370 = vpow.pop %v1369
        %v1371 = vmul.f32 %v1360, 1.442695
        %v1372 = vpow.pop %v1371
        %v1373 = vmul.f32 %v1361, 1.442695
        %v1374 = vpow.pop %v1373
        %v1375 = vmul.f32 %v1362, 1.442695
        %v1376 = vpow.pop %v1375
        %v1377 = vmul.f32 %v1363, 1.442695
        %v1378 = vpow.pop %v1377
        %v1379 = vmul.f32 %v1364, 1.442695
        %v1380 = vpow.pop %v1379
        %v1381 = vsel %vm930, %v1366, 0.0
        %1382 = vadd.xlane.f32.xlu0 %v1381
        %v1383 = vpop.xlane.xlu0 %1382
        %v1384 = vsel %vm930, %v1368, 0.0
        %1385 = vadd.xlane.f32.xlu0 %v1384
        %v1386 = vpop.xlane.xlu0 %1385
        %v1387 = vsel %vm930, %v1370, 0.0
        %1388 = vadd.xlane.f32.xlu0 %v1387
        %v1389 = vpop.xlane.xlu0 %1388
        %v1390 = vsel %vm930, %v1372, 0.0
        %1391 = vadd.xlane.f32.xlu0 %v1390
        %v1392 = vpop.xlane.xlu0 %1391
        %v1393 = vsel %vm930, %v1374, 0.0
        %1394 = vadd.xlane.f32.xlu0 %v1393
        %v1395 = vpop.xlane.xlu0 %1394
        %v1396 = vsel %vm930, %v1376, 0.0
        %1397 = vadd.xlane.f32.xlu0 %v1396
        %v1398 = vpop.xlane.xlu0 %1397
        %v1399 = vsel %vm930, %v1378, 0.0
        %1400 = vadd.xlane.f32.xlu0 %v1399
        %v1401 = vpop.xlane.xlu0 %1400
        %v1402 = vsel %vm930, %v1380, 0.0
        %1403 = vadd.xlane.f32.xlu0 %v1402
        %v1404 = vpop.xlane.xlu0 %1403
        %v1405 = vrcp.pop %v1383
        %v1406 = vrcp.pop %v1386
        %v1407 = vrcp.pop %v1389
        %v1408 = vrcp.pop %v1392
        %v1409 = vrcp.pop %v1395
        %v1410 = vrcp.pop %v1398
        %v1411 = vrcp.pop %v1401
        %v1412 = vrcp.pop %v1404
        %v1413 = vmul.f32 %v1366, %v1405
        %v1414 = vmul.f32 %v1368, %v1406
        %v1415 = vmul.f32 %v1370, %v1407
        %v1416 = vmul.f32 %v1372, %v1408
        %v1417 = vmul.f32 %v1374, %v1409
        %v1418 = vmul.f32 %v1376, %v1410
        %v1419 = vmul.f32 %v1378, %v1411
        %v1420 = vmul.f32 %v1380, %v1412
        %v1421 = vpack.c.bf16 %v1413, %v1413
        %v1422 = vpack.c.bf16 %v1414, %v1414
        %v1423 = vpack.c.bf16 %v1415, %v1415
        %v1424 = vpack.c.bf16 %v1416, %v1416
        %v1425 = vpack.c.bf16 %v1417, %v1417
        %v1426 = vpack.c.bf16 %v1418, %v1418
        %v1427 = vpack.c.bf16 %v1419, %v1419
        %v1428 = vpack.c.bf16 %v1420, %v1420
        %1429 = vrot.lane.b32.xlu0 %v919, 64
        %v1430 = vpop.permute.xlu0 %1429
        %v1432 = vsel %vm930, %v1421, 0
        %vm1434 = vcmask 1043456
        %v1436 = vsel %vm1434, %v1430, 0
        %1438 = vmatprep.subr.bf16.mxu0 0
        %1439 = vmatpush1.bf16.msra.mxu0 %v1436
        %1440 = vmatprep.subr.bf16.mxu0 0
        %1441 = vmatpush1.bf16.msra.mxu0 0
        %1442 = vmatprep.subr.bf16.mxu0 0
        %1443 = vmatpush1.bf16.msra.mxu0 0
        %1444 = vmatprep.subr.bf16.mxu0 0
        %1445 = vmatpush1.bf16.msra.mxu0 0
        %1446 = vmatprep.subr.bf16.mxu0 0
        %1447 = vmatpush1.bf16.msra.mxu0 0
        %1448 = vmatprep.subr.bf16.mxu0 0
        %1449 = vmatpush1.bf16.msra.mxu0 0
        %1450 = vmatprep.subr.bf16.mxu0 0
        %1451 = vmatpush1.bf16.msra.mxu0 0
        %1452 = vmatprep.subr.bf16.mxu0 0
        %1453 = vmatpush1.bf16.msra.mxu0 0
        %1454 = vmatprep.subr.bf16.mxu0 0
        %1455 = vmatpush1.bf16.msra.mxu0 0
        %1456 = vmatprep.subr.bf16.mxu0 0
        %1457 = vmatpush1.bf16.msra.mxu0 0
        %1458 = vmatprep.subr.bf16.mxu0 0
        %1459 = vmatpush1.bf16.msra.mxu0 0
        %1460 = vmatprep.subr.bf16.mxu0 0
        %1461 = vmatpush1.bf16.msra.mxu0 0
        %1462 = vmatprep.subr.bf16.mxu0 0
        %1463 = vmatpush1.bf16.msra.mxu0 0
        %1464 = vmatprep.subr.bf16.mxu0 0
        %1465 = vmatpush1.bf16.msra.mxu0 0
        %1466 = vmatprep.subr.bf16.mxu0 0
        %1467 = vmatpush1.bf16.msra.mxu0 0
        %1468 = vmatprep.subr.bf16.mxu0 0
        %1469 = vmatpush1.bf16.msra.mxu0 0
        %1470 = vmatprep.mubr.bf16.mxu0 0
        %1471 = vmatmul.mubr.bf16.gmra.mrb[0].mxu0 %v1432
        %v1472 = vpop.f32.mrb[0].mxu0
        %v1473 = vadd.f32 0.0, %v1472
        %v1474 = vpop.f32.mrb[0].mxu0
        %v1475 = vpop.f32.mrb[0].mxu0
        %v1476 = vpop.f32.mrb[0].mxu0
        %1477 = vdwg.mxu0
        %1478 = vrot.lane.b32.xlu0 %v920, 64
        %v1479 = vpop.permute.xlu0 %1478
        %v1481 = vsel %vm930, %v1422, 0
        %v1484 = vsel %vm1434, %v1479, 0
        %1486 = vmatprep.subr.bf16.mxu0 0
        %1487 = vmatpush1.bf16.msra.mxu0 %v1484
        %1488 = vmatprep.subr.bf16.mxu0 0
        %1489 = vmatpush1.bf16.msra.mxu0 0
        %1490 = vmatprep.subr.bf16.mxu0 0
        %1491 = vmatpush1.bf16.msra.mxu0 0
        %1492 = vmatprep.subr.bf16.mxu0 0
        %1493 = vmatpush1.bf16.msra.mxu0 0
        %1494 = vmatprep.subr.bf16.mxu0 0
        %1495 = vmatpush1.bf16.msra.mxu0 0
        %1496 = vmatprep.subr.bf16.mxu0 0
        %1497 = vmatpush1.bf16.msra.mxu0 0
        %1498 = vmatprep.subr.bf16.mxu0 0
        %1499 = vmatpush1.bf16.msra.mxu0 0
        %1500 = vmatprep.subr.bf16.mxu0 0
        %1501 = vmatpush1.bf16.msra.mxu0 0
        %1502 = vmatprep.subr.bf16.mxu0 0
        %1503 = vmatpush1.bf16.msra.mxu0 0
        %1504 = vmatprep.subr.bf16.mxu0 0
        %1505 = vmatpush1.bf16.msra.mxu0 0
        %1506 = vmatprep.subr.bf16.mxu0 0
        %1507 = vmatpush1.bf16.msra.mxu0 0
        %1508 = vmatprep.subr.bf16.mxu0 0
        %1509 = vmatpush1.bf16.msra.mxu0 0
        %1510 = vmatprep.subr.bf16.mxu0 0
        %1511 = vmatpush1.bf16.msra.mxu0 0
        %1512 = vmatprep.subr.bf16.mxu0 0
        %1513 = vmatpush1.bf16.msra.mxu0 0
        %1514 = vmatprep.subr.bf16.mxu0 0
        %1515 = vmatpush1.bf16.msra.mxu0 0
        %1516 = vmatprep.subr.bf16.mxu0 0
        %1517 = vmatpush1.bf16.msra.mxu0 0
        %1518 = vmatprep.mubr.bf16.mxu0 0
        %1519 = vmatmul.mubr.bf16.gmra.mrb[0].mxu0 %v1481
        %v1520 = vpop.f32.mrb[0].mxu0
        %v1521 = vadd.f32 0.0, %v1520
        %v1522 = vpop.f32.mrb[0].mxu0
        %v1523 = vpop.f32.mrb[0].mxu0
        %v1524 = vpop.f32.mrb[0].mxu0
        %1525 = vdwg.mxu0
        %1526 = vrot.lane.b32.xlu0 %v921, 64
        %v1527 = vpop.permute.xlu0 %1526
        %v1529 = vsel %vm930, %v1423, 0
        %v1532 = vsel %vm1434, %v1527, 0
        %1534 = vmatprep.subr.bf16.mxu0 0
        %1535 = vmatpush1.bf16.msra.mxu0 %v1532
        %1536 = vmatprep.subr.bf16.mxu0 0
        %1537 = vmatpush1.bf16.msra.mxu0 0
        %1538 = vmatprep.subr.bf16.mxu0 0
        %1539 = vmatpush1.bf16.msra.mxu0 0
        %1540 = vmatprep.subr.bf16.mxu0 0
        %1541 = vmatpush1.bf16.msra.mxu0 0
        %1542 = vmatprep.subr.bf16.mxu0 0
        %1543 = vmatpush1.bf16.msra.mxu0 0
        %1544 = vmatprep.subr.bf16.mxu0 0
        %1545 = vmatpush1.bf16.msra.mxu0 0
        %1546 = vmatprep.subr.bf16.mxu0 0
        %1547 = vmatpush1.bf16.msra.mxu0 0
        %1548 = vmatprep.subr.bf16.mxu0 0
        %1549 = vmatpush1.bf16.msra.mxu0 0
        %1550 = vmatprep.subr.bf16.mxu0 0
        %1551 = vmatpush1.bf16.msra.mxu0 0
        %1552 = vmatprep.subr.bf16.mxu0 0
        %1553 = vmatpush1.bf16.msra.mxu0 0
        %1554 = vmatprep.subr.bf16.mxu0 0
        %1555 = vmatpush1.bf16.msra.mxu0 0
        %1556 = vmatprep.subr.bf16.mxu0 0
        %1557 = vmatpush1.bf16.msra.mxu0 0
        %1558 = vmatprep.subr.bf16.mxu0 0
        %1559 = vmatpush1.bf16.msra.mxu0 0
        %1560 = vmatprep.subr.bf16.mxu0 0
        %1561 = vmatpush1.bf16.msra.mxu0 0
        %1562 = vmatprep.subr.bf16.mxu0 0
        %1563 = vmatpush1.bf16.msra.mxu0 0
        %1564 = vmatprep.subr.bf16.mxu0 0
        %1565 = vmatpush1.bf16.msra.mxu0 0
        %1566 = vmatprep.mubr.bf16.mxu0 0
        %1567 = vmatmul.mubr.bf16.gmra.mrb[0].mxu0 %v1529
        %v1568 = vpop.f32.mrb[0].mxu0
        %v1569 = vadd.f32 0.0, %v1568
        %v1570 = vpop.f32.mrb[0].mxu0
        %v1571 = vpop.f32.mrb[0].mxu0
        %v1572 = vpop.f32.mrb[0].mxu0
        %1573 = vdwg.mxu0
        %1574 = vrot.lane.b32.xlu0 %v922, 64
        %v1575 = vpop.permute.xlu0 %1574
        %v1577 = vsel %vm930, %v1424, 0
        %v1580 = vsel %vm1434, %v1575, 0
        %1582 = vmatprep.subr.bf16.mxu0 0
        %1583 = vmatpush1.bf16.msra.mxu0 %v1580
        %1584 = vmatprep.subr.bf16.mxu0 0
        %1585 = vmatpush1.bf16.msra.mxu0 0
        %1586 = vmatprep.subr.bf16.mxu0 0
        %1587 = vmatpush1.bf16.msra.mxu0 0
        %1588 = vmatprep.subr.bf16.mxu0 0
        %1589 = vmatpush1.bf16.msra.mxu0 0
        %1590 = vmatprep.subr.bf16.mxu0 0
        %1591 = vmatpush1.bf16.msra.mxu0 0
        %1592 = vmatprep.subr.bf16.mxu0 0
        %1593 = vmatpush1.bf16.msra.mxu0 0
        %1594 = vmatprep.subr.bf16.mxu0 0
        %1595 = vmatpush1.bf16.msra.mxu0 0
        %1596 = vmatprep.subr.bf16.mxu0 0
        %1597 = vmatpush1.bf16.msra.mxu0 0
        %1598 = vmatprep.subr.bf16.mxu0 0
        %1599 = vmatpush1.bf16.msra.mxu0 0
        %1600 = vmatprep.subr.bf16.mxu0 0
        %1601 = vmatpush1.bf16.msra.mxu0 0
        %1602 = vmatprep.subr.bf16.mxu0 0
        %1603 = vmatpush1.bf16.msra.mxu0 0
        %1604 = vmatprep.subr.bf16.mxu0 0
        %1605 = vmatpush1.bf16.msra.mxu0 0
        %1606 = vmatprep.subr.bf16.mxu0 0
        %1607 = vmatpush1.bf16.msra.mxu0 0
        %1608 = vmatprep.subr.bf16.mxu0 0
        %1609 = vmatpush1.bf16.msra.mxu0 0
        %1610 = vmatprep.subr.bf16.mxu0 0
        %1611 = vmatpush1.bf16.msra.mxu0 0
        %1612 = vmatprep.subr.bf16.mxu0 0
        %1613 = vmatpush1.bf16.msra.mxu0 0
        %1614 = vmatprep.mubr.bf16.mxu0 0
        %1615 = vmatmul.mubr.bf16.gmra.mrb[0].mxu0 %v1577
        %v1616 = vpop.f32.mrb[0].mxu0
        %v1617 = vadd.f32 0.0, %v1616
        %v1618 = vpop.f32.mrb[0].mxu0
        %v1619 = vpop.f32.mrb[0].mxu0
        %v1620 = vpop.f32.mrb[0].mxu0
        %1621 = vdwg.mxu0
        %1622 = vrot.lane.b32.xlu0 %v923, 64
        %v1623 = vpop.permute.xlu0 %1622
        %v1625 = vsel %vm930, %v1425, 0
        %v1628 = vsel %vm1434, %v1623, 0
        %1630 = vmatprep.subr.bf16.mxu0 0
        %1631 = vmatpush1.bf16.msra.mxu0 %v1628
        %1632 = vmatprep.subr.bf16.mxu0 0
        %1633 = vmatpush1.bf16.msra.mxu0 0
        %1634 = vmatprep.subr.bf16.mxu0 0
        %1635 = vmatpush1.bf16.msra.mxu0 0
        %1636 = vmatprep.subr.bf16.mxu0 0
        %1637 = vmatpush1.bf16.msra.mxu0 0
        %1638 = vmatprep.subr.bf16.mxu0 0
        %1639 = vmatpush1.bf16.msra.mxu0 0
        %1640 = vmatprep.subr.bf16.mxu0 0
        %1641 = vmatpush1.bf16.msra.mxu0 0
        %1642 = vmatprep.subr.bf16.mxu0 0
        %1643 = vmatpush1.bf16.msra.mxu0 0
        %1644 = vmatprep.subr.bf16.mxu0 0
        %1645 = vmatpush1.bf16.msra.mxu0 0
        %1646 = vmatprep.subr.bf16.mxu0 0
        %1647 = vmatpush1.bf16.msra.mxu0 0
        %1648 = vmatprep.subr.bf16.mxu0 0
        %1649 = vmatpush1.bf16.msra.mxu0 0
        %1650 = vmatprep.subr.bf16.mxu0 0
        %1651 = vmatpush1.bf16.msra.mxu0 0
        %1652 = vmatprep.subr.bf16.mxu0 0
        %1653 = vmatpush1.bf16.msra.mxu0 0
        %1654 = vmatprep.subr.bf16.mxu0 0
        %1655 = vmatpush1.bf16.msra.mxu0 0
        %1656 = vmatprep.subr.bf16.mxu0 0
        %1657 = vmatpush1.bf16.msra.mxu0 0
        %1658 = vmatprep.subr.bf16.mxu0 0
        %1659 = vmatpush1.bf16.msra.mxu0 0
        %1660 = vmatprep.subr.bf16.mxu0 0
        %1661 = vmatpush1.bf16.msra.mxu0 0
        %1662 = vmatprep.mubr.bf16.mxu0 0
        %1663 = vmatmul.mubr.bf16.gmra.mrb[0].mxu0 %v1625
        %v1664 = vpop.f32.mrb[0].mxu0
        %v1665 = vadd.f32 0.0, %v1664
        %v1666 = vpop.f32.mrb[0].mxu0
        %v1667 = vpop.f32.mrb[0].mxu0
        %v1668 = vpop.f32.mrb[0].mxu0
        %1669 = vdwg.mxu0
        %1670 = vrot.lane.b32.xlu0 %v924, 64
        %v1671 = vpop.permute.xlu0 %1670
        %v1673 = vsel %vm930, %v1426, 0
        %v1676 = vsel %vm1434, %v1671, 0
        %1678 = vmatprep.subr.bf16.mxu0 0
        %1679 = vmatpush1.bf16.msra.mxu0 %v1676
        %1680 = vmatprep.subr.bf16.mxu0 0
        %1681 = vmatpush1.bf16.msra.mxu0 0
        %1682 = vmatprep.subr.bf16.mxu0 0
        %1683 = vmatpush1.bf16.msra.mxu0 0
        %1684 = vmatprep.subr.bf16.mxu0 0
        %1685 = vmatpush1.bf16.msra.mxu0 0
        %1686 = vmatprep.subr.bf16.mxu0 0
        %1687 = vmatpush1.bf16.msra.mxu0 0
        %1688 = vmatprep.subr.bf16.mxu0 0
        %1689 = vmatpush1.bf16.msra.mxu0 0
        %1690 = vmatprep.subr.bf16.mxu0 0
        %1691 = vmatpush1.bf16.msra.mxu0 0
        %1692 = vmatprep.subr.bf16.mxu0 0
        %1693 = vmatpush1.bf16.msra.mxu0 0
        %1694 = vmatprep.subr.bf16.mxu0 0
        %1695 = vmatpush1.bf16.msra.mxu0 0
        %1696 = vmatprep.subr.bf16.mxu0 0
        %1697 = vmatpush1.bf16.msra.mxu0 0
        %1698 = vmatprep.subr.bf16.mxu0 0
        %1699 = vmatpush1.bf16.msra.mxu0 0
        %1700 = vmatprep.subr.bf16.mxu0 0
        %1701 = vmatpush1.bf16.msra.mxu0 0
        %1702 = vmatprep.subr.bf16.mxu0 0
        %1703 = vmatpush1.bf16.msra.mxu0 0
        %1704 = vmatprep.subr.bf16.mxu0 0
        %1705 = vmatpush1.bf16.msra.mxu0 0
        %1706 = vmatprep.subr.bf16.mxu0 0
        %1707 = vmatpush1.bf16.msra.mxu0 0
        %1708 = vmatprep.subr.bf16.mxu0 0
        %1709 = vmatpush1.bf16.msra.mxu0 0
        %1710 = vmatprep.mubr.bf16.mxu0 0
        %1711 = vmatmul.mubr.bf16.gmra.mrb[0].mxu0 %v1673
        %v1712 = vpop.f32.mrb[0].mxu0
        %v1713 = vadd.f32 0.0, %v1712
        %v1714 = vpop.f32.mrb[0].mxu0
        %v1715 = vpop.f32.mrb[0].mxu0
        %v1716 = vpop.f32.mrb[0].mxu0
        %1717 = vdwg.mxu0
        %1718 = vrot.lane.b32.xlu0 %v925, 64
        %v1719 = vpop.permute.xlu0 %1718
        %v1721 = vsel %vm930, %v1427, 0
        %v1724 = vsel %vm1434, %v1719, 0
        %1726 = vmatprep.subr.bf16.mxu0 0
        %1727 = vmatpush1.bf16.msra.mxu0 %v1724
        %1728 = vmatprep.subr.bf16.mxu0 0
        %1729 = vmatpush1.bf16.msra.mxu0 0
        %1730 = vmatprep.subr.bf16.mxu0 0
        %1731 = vmatpush1.bf16.msra.mxu0 0
        %1732 = vmatprep.subr.bf16.mxu0 0
        %1733 = vmatpush1.bf16.msra.mxu0 0
        %1734 = vmatprep.subr.bf16.mxu0 0
        %1735 = vmatpush1.bf16.msra.mxu0 0
        %1736 = vmatprep.subr.bf16.mxu0 0
        %1737 = vmatpush1.bf16.msra.mxu0 0
        %1738 = vmatprep.subr.bf16.mxu0 0
        %1739 = vmatpush1.bf16.msra.mxu0 0
        %1740 = vmatprep.subr.bf16.mxu0 0
        %1741 = vmatpush1.bf16.msra.mxu0 0
        %1742 = vmatprep.subr.bf16.mxu0 0
        %1743 = vmatpush1.bf16.msra.mxu0 0
        %1744 = vmatprep.subr.bf16.mxu0 0
        %1745 = vmatpush1.bf16.msra.mxu0 0
        %1746 = vmatprep.subr.bf16.mxu0 0
        %1747 = vmatpush1.bf16.msra.mxu0 0
        %1748 = vmatprep.subr.bf16.mxu0 0
        %1749 = vmatpush1.bf16.msra.mxu0 0
        %1750 = vmatprep.subr.bf16.mxu0 0
        %1751 = vmatpush1.bf16.msra.mxu0 0
        %1752 = vmatprep.subr.bf16.mxu0 0
        %1753 = vmatpush1.bf16.msra.mxu0 0
        %1754 = vmatprep.subr.bf16.mxu0 0
        %1755 = vmatpush1.bf16.msra.mxu0 0
        %1756 = vmatprep.subr.bf16.mxu0 0
        %1757 = vmatpush1.bf16.msra.mxu0 0
        %1758 = vmatprep.mubr.bf16.mxu0 0
        %1759 = vmatmul.mubr.bf16.gmra.mrb[0].mxu0 %v1721
        %v1760 = vpop.f32.mrb[0].mxu0
        %v1761 = vadd.f32 0.0, %v1760
        %v1762 = vpop.f32.mrb[0].mxu0
        %v1763 = vpop.f32.mrb[0].mxu0
        %v1764 = vpop.f32.mrb[0].mxu0
        %1765 = vdwg.mxu0
        %1766 = vrot.lane.b32.xlu0 %v926, 64
        %v1767 = vpop.permute.xlu0 %1766
        %v1769 = vsel %vm930, %v1428, 0
        %v1772 = vsel %vm1434, %v1767, 0
        %1774 = vmatprep.subr.bf16.mxu0 0
        %1775 = vmatpush1.bf16.msra.mxu0 %v1772
        %1776 = vmatprep.subr.bf16.mxu0 0
        %1777 = vmatpush1.bf16.msra.mxu0 0
        %1778 = vmatprep.subr.bf16.mxu0 0
        %1779 = vmatpush1.bf16.msra.mxu0 0
        %1780 = vmatprep.subr.bf16.mxu0 0
        %1781 = vmatpush1.bf16.msra.mxu0 0
        %1782 = vmatprep.subr.bf16.mxu0 0
        %1783 = vmatpush1.bf16.msra.mxu0 0
        %1784 = vmatprep.subr.bf16.mxu0 0
        %1785 = vmatpush1.bf16.msra.mxu0 0
        %1786 = vmatprep.subr.bf16.mxu0 0
        %1787 = vmatpush1.bf16.msra.mxu0 0
        %1788 = vmatprep.subr.bf16.mxu0 0
        %1789 = vmatpush1.bf16.msra.mxu0 0
        %1790 = vmatprep.subr.bf16.mxu0 0
        %1791 = vmatpush1.bf16.msra.mxu0 0
        %1792 = vmatprep.subr.bf16.mxu0 0
        %1793 = vmatpush1.bf16.msra.mxu0 0
        %1794 = vmatprep.subr.bf16.mxu0 0
        %1795 = vmatpush1.bf16.msra.mxu0 0
        %1796 = vmatprep.subr.bf16.mxu0 0
        %1797 = vmatpush1.bf16.msra.mxu0 0
        %1798 = vmatprep.subr.bf16.mxu0 0
        %1799 = vmatpush1.bf16.msra.mxu0 0
        %1800 = vmatprep.subr.bf16.mxu0 0
        %1801 = vmatpush1.bf16.msra.mxu0 0
        %1802 = vmatprep.subr.bf16.mxu0 0
        %1803 = vmatpush1.bf16.msra.mxu0 0
        %1804 = vmatprep.subr.bf16.mxu0 0
        %1805 = vmatpush1.bf16.msra.mxu0 0
        %1806 = vmatprep.mubr.bf16.mxu0 0
        %1807 = vmatmul.mubr.bf16.gmra.mrb[0].mxu0 %v1769
        %v1808 = vpop.f32.mrb[0].mxu0
        %v1809 = vadd.f32 0.0, %v1808
        %v1810 = vpop.f32.mrb[0].mxu0
        %v1811 = vpop.f32.mrb[0].mxu0
        %v1812 = vpop.f32.mrb[0].mxu0
        %1813 = vdwg.mxu0
        %1816 = vrot.lane.b32.xlu0 %v1569, 8
        %v1817 = vpop.permute.xlu0 %1816
        %1818 = vrot.lane.b32.xlu0 %v1617, 8
        %v1819 = vpop.permute.xlu0 %1818
        %1824 = vrot.lane.b32.xlu0 %v1665, 16
        %v1825 = vpop.permute.xlu0 %1824
        %1826 = vrot.lane.b32.xlu0 %v1713, 16
        %v1827 = vpop.permute.xlu0 %1826
        %1832 = vrot.lane.b32.xlu0 %v1761, 24
        %v1833 = vpop.permute.xlu0 %1832
        %1834 = vrot.lane.b32.xlu0 %v1809, 24
        %v1835 = vpop.permute.xlu0 %1834
        %v1838 = vsel %vm930, %v1473, %v1817
        %v1839 = vsel %vm930, %v1521, %v1819
        %vm1840 = vcmask 130048
        %v1841 = vsel %vm1840, %v1838, %v1825
        %v1842 = vsel %vm1840, %v1839, %v1827
        %vm1843 = vcmask 195584
        %v1844 = vsel %vm1843, %v1841, %v1833
        %v1845 = vsel %vm1843, %v1842, %v1835
        %v1846 = vpack.c.bf16 %v1845, %v1844
        %v1847 = vld [vmem:[%s481] sm:$0xf]
        %v1848 = vld [vmem:[%s481 + $0x4] sm:$0xf]
        %v1849 = vld [vmem:[%s481 + $0x8] sm:$0xf]
        %v1850 = vld [vmem:[%s481 + $0xc] sm:$0xf]
        %v1851 = vlaneseq
        %v1852 = vshrl.u32 %v1851, 7
        %v1853 = vsub.s32 0, %v1852
        %v1854 = vrot.slane %v768, %v1853
        %v1859 = vunpack.c.l.b16 %v1847
        %v1860 = vunpack.c.l.b16 %v1848
        %v1861 = vunpack.c.l.b16 %v1849
        %v1862 = vunpack.c.l.b16 %v1850
        %v1863 = vpack.c.b16 %v1860, %v1859
        %v1864 = vpack.c.b16 %v1862, %v1861
        %v1868 = vsel %vm772, %v1846, 0
        %1870 = vmatprep.subr.bf16.mxu0 0
        %1871 = vmatpush1.bf16.msra.mxu0 %v1863
        %1872 = vmatprep.subr.bf16.mxu0 0
        %1873 = vmatpush1.bf16.msra.mxu0 %v1864
        %1874 = vmatprep.subr.bf16.mxu0 0
        %1875 = vmatpush1.bf16.msra.mxu0 0
        %1876 = vmatprep.subr.bf16.mxu0 0
        %1877 = vmatpush1.bf16.msra.mxu0 0
        %1878 = vmatprep.subr.bf16.mxu0 0
        %1879 = vmatpush1.bf16.msra.mxu0 0
        %1880 = vmatprep.subr.bf16.mxu0 0
        %1881 = vmatpush1.bf16.msra.mxu0 0
        %1882 = vmatprep.subr.bf16.mxu0 0
        %1883 = vmatpush1.bf16.msra.mxu0 0
        %1884 = vmatprep.subr.bf16.mxu0 0
        %1885 = vmatpush1.bf16.msra.mxu0 0
        %1886 = vmatprep.subr.bf16.mxu0 0
        %1887 = vmatpush1.bf16.msra.mxu0 0
        %1888 = vmatprep.subr.bf16.mxu0 0
        %1889 = vmatpush1.bf16.msra.mxu0 0
        %1890 = vmatprep.subr.bf16.mxu0 0
        %1891 = vmatpush1.bf16.msra.mxu0 0
        %1892 = vmatprep.subr.bf16.mxu0 0
        %1893 = vmatpush1.bf16.msra.mxu0 0
        %1894 = vmatprep.subr.bf16.mxu0 0
        %1895 = vmatpush1.bf16.msra.mxu0 0
        %1896 = vmatprep.subr.bf16.mxu0 0
        %1897 = vmatpush1.bf16.msra.mxu0 0
        %1898 = vmatprep.subr.bf16.mxu0 0
        %1899 = vmatpush1.bf16.msra.mxu0 0
        %1900 = vmatprep.subr.bf16.mxu0 0
        %1901 = vmatpush1.bf16.msra.mxu0 0
        %1902 = vmatprep.mubr.bf16.mxu0 0
        %1903 = vmatmul.mubr.bf16.gmra.mrb[0].mxu0 %v1868
        %v1904 = vpop.f32.mrb[0].mxu0
        %v1905 = vadd.f32 %v1854, %v1904
        %v1906 = vpop.f32.mrb[0].mxu0
        %v1907 = vpop.f32.mrb[0].mxu0
        %v1908 = vadd.f32 %v1854, %v1907
        %v1909 = vpop.f32.mrb[0].mxu0
        %1910 = vdwg.mxu0
        %v1911 = vadd.f32 %v762, %v1905
        %v1912 = vadd.f32 %v763, %v1908
        %v1913 = vsel %vm772, %v1911, 0.0
        %1914 = vadd.xlane.f32.xlu0 %v1913
        %v1915 = vpop.xlane.xlu0 %1914
        %v1916 = vsel %vm772, %v1912, 0.0
        %1917 = vadd.xlane.f32.xlu0 %v1916
        %v1918 = vpop.xlane.xlu0 %1917
        %v1919 = vmul.f32 %v1915, %v779
        %v1920 = vmul.f32 %v1918, %v779
        %v1921 = vsub.f32 %v1911, %v1919
        %v1922 = vsub.f32 %v1912, %v1920
        %v1923 = vmul.f32 %v1921, %v1921
        %v1924 = vmul.f32 %v1922, %v1922
        %v1925 = vsel %vm772, %v1923, 0.0
        %1926 = vadd.xlane.f32.xlu0 %v1925
        %v1927 = vpop.xlane.xlu0 %1926
        %v1928 = vsel %vm772, %v1924, 0.0
        %1929 = vadd.xlane.f32.xlu0 %v1928
        %v1930 = vpop.xlane.xlu0 %1929
        %v1931 = vmul.f32 %v1927, %v779
        %v1932 = vmul.f32 %v1930, %v779
        %v1933 = vadd.f32 %v1931, 1e-05
        %v1934 = vadd.f32 %v1932, 1e-05
        %v1935 = vrsqrt.pop %v1933
        %v1936 = vrsqrt.pop %v1934
        %v1937 = vmul.f32 %v1921, %v1935
        %v1938 = vmul.f32 %v1922, %v1936
        %v1939 = vlaneseq
        %v1940 = vshrl.u32 %v1939, 7
        %v1941 = vsub.s32 0, %v1940
        %v1942 = vrot.slane %v766, %v1941
        %v1943 = vmul.f32 %v1937, %v1942
        %v1944 = vmul.f32 %v1938, %v1942
        %v1945 = vlaneseq
        %v1946 = vshrl.u32 %v1945, 7
        %v1947 = vsub.s32 0, %v1946
        %v1948 = vrot.slane %v767, %v1947
        %v1949 = vadd.f32 %v1943, %v1948
        %v1950 = vadd.f32 %v1944, %v1948
        %v1951 = vpack.c.bf16 %v1949, %v1949
        %v1952 = vpack.c.bf16 %v1950, %v1950
        %v1953 = vld [vmem:[%s486] sm:$0xf]
        %v1954 = vld [vmem:[%s486 + $0x4] sm:$0xf]
        %v1955 = vld [vmem:[%s486 + $0x8] sm:$0xf]
        %v1956 = vld [vmem:[%s486 + $0xc] sm:$0xf]
        %v1957 = vlaneseq
        %v1958 = vshrl.u32 %v1957, 7
        %v1959 = vsub.s32 0, %v1958
        %v1960 = vrot.slane %v771, %v1959
        %v1963 = vunpack.c.l.b16 %v1951
        %v1964 = vunpack.c.l.b16 %v1952
        %v1965 = vpack.c.b16 %v1964, %v1963
        %v1970 = vunpack.c.l.b16 %v1953
        %v1971 = vunpack.c.l.b16 %v1954
        %v1972 = vunpack.c.l.b16 %v1955
        %v1973 = vunpack.c.l.b16 %v1956
        %v1974 = vpack.c.b16 %v1971, %v1970
        %v1975 = vpack.c.b16 %v1973, %v1972
        %v1979 = vsel %vm772, %v1965, 0
        %1981 = vmatprep.subr.bf16.mxu0 0
        %1982 = vmatpush1.bf16.msra.mxu0 %v1974
        %1983 = vmatprep.subr.bf16.mxu0 0
        %1984 = vmatpush1.bf16.msra.mxu0 %v1975
        %1985 = vmatprep.subr.bf16.mxu0 0
        %1986 = vmatpush1.bf16.msra.mxu0 0
        %1987 = vmatprep.subr.bf16.mxu0 0
        %1988 = vmatpush1.bf16.msra.mxu0 0
        %1989 = vmatprep.subr.bf16.mxu0 0
        %1990 = vmatpush1.bf16.msra.mxu0 0
        %1991 = vmatprep.subr.bf16.mxu0 0
        %1992 = vmatpush1.bf16.msra.mxu0 0
        %1993 = vmatprep.subr.bf16.mxu0 0
        %1994 = vmatpush1.bf16.msra.mxu0 0
        %1995 = vmatprep.subr.bf16.mxu0 0
        %1996 = vmatpush1.bf16.msra.mxu0 0
        %1997 = vmatprep.subr.bf16.mxu0 0
        %1998 = vmatpush1.bf16.msra.mxu0 0
        %1999 = vmatprep.subr.bf16.mxu0 0
        %2000 = vmatpush1.bf16.msra.mxu0 0
        %2001 = vmatprep.subr.bf16.mxu0 0
        %2002 = vmatpush1.bf16.msra.mxu0 0
        %2003 = vmatprep.subr.bf16.mxu0 0
        %2004 = vmatpush1.bf16.msra.mxu0 0
        %2005 = vmatprep.subr.bf16.mxu0 0
        %2006 = vmatpush1.bf16.msra.mxu0 0
        %2007 = vmatprep.subr.bf16.mxu0 0
        %2008 = vmatpush1.bf16.msra.mxu0 0
        %2009 = vmatprep.subr.bf16.mxu0 0
        %2010 = vmatpush1.bf16.msra.mxu0 0
        %2011 = vmatprep.subr.bf16.mxu0 0
        %2012 = vmatpush1.bf16.msra.mxu0 0
        %2013 = vmatprep.mubr.bf16.mxu0 0
        %2014 = vmatmul.mubr.bf16.gmra.mrb[0].mxu0 %v1979
        %v2015 = vpop.f32.mrb[0].mxu0
        %v2016 = vadd.f32 %v1960, %v2015
        %v2017 = vpop.f32.mrb[0].mxu0
        %v2018 = vpop.f32.mrb[0].mxu0
        %v2019 = vadd.f32 %v1960, %v2018
        %v2020 = vpop.f32.mrb[0].mxu0
        %2021 = vdwg.mxu0
        %v2022 = vmul.f32 %v2016, 1.702
        %v2023 = vmul.f32 %v2019, 1.702
        %v2024 = vxor.u32 %v2022, 2147483648
        %v2025 = vxor.u32 %v2023, 2147483648
        %v2026 = vmul.f32 %v2024, 1.442695
        %v2027 = vpow.pop %v2026
        %v2028 = vmul.f32 %v2025, 1.442695
        %v2029 = vpow.pop %v2028
        %v2030 = vadd.f32 %v2027, 1.0
        %v2031 = vadd.f32 %v2029, 1.0
        %v2032 = vrcp.pop %v2030
        %v2033 = vmul.f32 1.0, %v2032
        %v2034 = vrcp.pop %v2031
        %v2035 = vmul.f32 1.0, %v2034
        %v2036 = vmul.f32 %v2016, %v2033
        %v2037 = vmul.f32 %v2019, %v2035
        %v2038 = vpack.c.bf16 %v2037, %v2036
        %v2039 = vld [vmem:[%s491] sm:$0xf]
        %v2040 = vld [vmem:[%s491 + $0x4] sm:$0xf]
        %v2041 = vld [vmem:[%s491 + $0x8] sm:$0xf]
        %v2042 = vld [vmem:[%s491 + $0xc] sm:$0xf]
        %v2043 = vld [vmem:[%s491 + $0x10] sm:$0xf]
        %v2044 = vld [vmem:[%s491 + $0x14] sm:$0xf]
        %v2045 = vld [vmem:[%s491 + $0x18] sm:$0xf]
        %v2046 = vld [vmem:[%s491 + $0x1c] sm:$0xf]
        %v2047 = vlaneseq
        %v2048 = vshrl.u32 %v2047, 7
        %v2049 = vsub.s32 0, %v2048
        %v2050 = vrot.slane %v769, %v2049
        %v2059 = vunpack.c.l.b16 %v2039
        %v2060 = vunpack.c.l.b16 %v2040
        %v2061 = vunpack.c.l.b16 %v2041
        %v2062 = vunpack.c.l.b16 %v2042
        %v2063 = vunpack.c.l.b16 %v2043
        %v2064 = vunpack.c.l.b16 %v2044
        %v2065 = vunpack.c.l.b16 %v2045
        %v2066 = vunpack.c.l.b16 %v2046
        %v2067 = vpack.c.b16 %v2060, %v2059
        %v2068 = vpack.c.b16 %v2062, %v2061
        %v2069 = vpack.c.b16 %v2064, %v2063
        %v2070 = vpack.c.b16 %v2066, %v2065
        %vm2075 = vcmask 523264
        %v2077 = vsel %vm2075, %v2038, 0
        %2079 = vmatprep.subr.bf16.mxu0 0
        %2080 = vmatpush1.bf16.msra.mxu0 %v2067
        %2081 = vmatprep.subr.bf16.mxu0 0
        %2082 = vmatpush1.bf16.msra.mxu0 %v2068
        %2083 = vmatprep.subr.bf16.mxu0 0
        %2084 = vmatpush1.bf16.msra.mxu0 %v2069
        %2085 = vmatprep.subr.bf16.mxu0 0
        %2086 = vmatpush1.bf16.msra.mxu0 %v2070
        %2087 = vmatprep.subr.bf16.mxu0 0
        %2088 = vmatpush1.bf16.msra.mxu0 0
        %2089 = vmatprep.subr.bf16.mxu0 0
        %2090 = vmatpush1.bf16.msra.mxu0 0
        %2091 = vmatprep.subr.bf16.mxu0 0
        %2092 = vmatpush1.bf16.msra.mxu0 0
        %2093 = vmatprep.subr.bf16.mxu0 0
        %2094 = vmatpush1.bf16.msra.mxu0 0
        %2095 = vmatprep.subr.bf16.mxu0 0
        %2096 = vmatpush1.bf16.msra.mxu0 0
        %2097 = vmatprep.subr.bf16.mxu0 0
        %2098 = vmatpush1.bf16.msra.mxu0 0
        %2099 = vmatprep.subr.bf16.mxu0 0
        %2100 = vmatpush1.bf16.msra.mxu0 0
        %2101 = vmatprep.subr.bf16.mxu0 0
        %2102 = vmatpush1.bf16.msra.mxu0 0
        %2103 = vmatprep.subr.bf16.mxu0 0
        %2104 = vmatpush1.bf16.msra.mxu0 0
        %2105 = vmatprep.subr.bf16.mxu0 0
        %2106 = vmatpush1.bf16.msra.mxu0 0
        %2107 = vmatprep.subr.bf16.mxu0 0
        %2108 = vmatpush1.bf16.msra.mxu0 0
        %2109 = vmatprep.subr.bf16.mxu0 0
        %2110 = vmatpush1.bf16.msra.mxu0 0
        %2111 = vmatprep.mubr.bf16.mxu0 0
        %2112 = vmatmul.mubr.bf16.gmra.mrb[0].mxu0 %v2077
        %v2113 = vpop.f32.mrb[0].mxu0
        %v2114 = vadd.f32 %v2050, %v2113
        %v2115 = vpop.f32.mrb[0].mxu0
        %v2116 = vpop.f32.mrb[0].mxu0
        %v2117 = vadd.f32 %v2050, %v2116
        %v2118 = vpop.f32.mrb[0].mxu0
        %2119 = vdwg.mxu0
        %v2120 = vadd.f32 %v1911, %v2114
        %v2121 = vadd.f32 %v1912, %v2117
        %2122 = vst.msk [vmem:[#allocation2] sm:$0xff] %vm772, %v2120
        %2123 = vst.msk [vmem:[#allocation2 + $0x8] sm:$0xff] %vm772, %v2121
        %p2124 = scmp.eq.s32.totalorder %s28, 1
        // Predicated region
        $region69: #{tpu_custom_call.1} parent=63 // pred_check
          %p2125 = pneg %p2124
        $region70: #{tpu_custom_call.1} parent=63 // pred_check_branch
          %2127 = sbr.rel (%p2125) target = $region72
        $region71: #{tpu_custom_call.1} parent=63 // pred_region
          %vm2128 = vcmask 258049
          %2129 = vst.msk [vmem:[#allocation3 - $0x1] sm:$0x1e] %vm2128, %v2120
          %2130 = vst.msk [vmem:[#allocation3 + $0x3] sm:$0x1e] %vm2128, %v2121
        $region72: #{tpu_custom_call.1} parent=63 // pred_fallthru
          _
        // Predicated region
        $region73: #{tpu_custom_call.1} parent=63 // pred_check
          %p2131 = pneg %p314
        $region74: #{tpu_custom_call.1} parent=63 // pred_check_branch
          %2133 = sbr.rel (%p2131) target = $region76
        $region75: #{tpu_custom_call.1} parent=63 // pred_region
          %s2134 = smul.u32 2, %s27
          %s2136 = ssub.s32 128, 128
          %2137 = vsyncadd [#allocation4], %s2136
          %s2138 = smul.addr %s2134, 64
          %s2139 = scalar_lea.hbm %s11, %s2138
          %s2140 = sshll.u32 [#allocation3], 4
          %s2141 = int_to_ptr.vmem [resolvable:$true] %s2140
          %2146 = dma.vmem_to_hbm [thread:$0]  %s2141, 128, %s2139, [#allocation4], 64, 64, 4
        $region76: #{tpu_custom_call.1} parent=63 // pred_fallthru
          _
        // Predicated region
        $region77: #{tpu_custom_call.1} parent=63 // pred_check
          %p2147 = pneg %p314
        $region78: #{tpu_custom_call.1} parent=63 // pred_check_branch
          %2149 = sbr.rel (%p2147) target = $region80
        $region79: #{tpu_custom_call.1} parent=63 // pred_region
          %2150 = dma.done [#allocation4], 128
        $region80: #{tpu_custom_call.1} parent=63 // pred_fallthru
          _
      $region64: #{tpu_custom_call.1} parent=5 // pred_fallthru
        _
      %p2151 = scmp.le.s32.totalorder 2, %s18
      // Predicated region
      $region81: #{tpu_custom_call.1} parent=5 // pred_check
        %p2152 = pneg %p2151
      $region82: #{tpu_custom_call.1} parent=5 // pred_check_branch
        %2154 = sbr.rel (%p2152) target = $region84
      $region83: #{tpu_custom_call.1} parent=5 // pred_region
        %s2155 = ssub.s32 %s18, 2
      $region84: #{tpu_custom_call.1} parent=5 // pred_fallthru
        _
    $region6: #{tpu_custom_call.1} parent=1 // loop_footer
      %s22 = sadd.s32 1, %s18
    $region7: #{tpu_custom_call.1} parent=1 // loop_footer_branch
      %17 = sbr.rel target = $region3
    $region8: #{tpu_custom_call.1} parent=1 // loop_exit
      _
    %2156 = vsyncpa [#allocation4], 1
    %s2157 = scalar_lea.sflag [#allocation4], 1
    %2158 = vsyncpa %s2157, 1

</llo_original>
